<compile_context>
chip_gen: v7x
topology: tpu7x:2x2x1
jax: 0.10.0
libtpu: 0.0.40
codegen_flags: <defaults>
</compile_context>

<pallas_src>
import math

import jax
import jax.numpy as jnp
from jax.experimental import pallas as pl
from jax.experimental.pallas import tpu as pltpu


def _layernorm(x, gamma, beta, eps=1e-5):
    mu = jnp.mean(x, axis=-1, keepdims=True)
    var = jnp.mean((x - mu) ** 2, axis=-1, keepdims=True)
    return (x - mu) * jax.lax.rsqrt(var + eps) * gamma + beta


def make_block_kernel(n_head):
    def block_kernel(x_ref,
                     ln1_g_ref, ln1_b_ref,
                     wq_ref, wk_ref, wv_ref,
                     bq_ref, bk_ref, bv_ref,
                     wproj_ref, bproj_ref,
                     ln2_g_ref, ln2_b_ref,
                     wfc_ref, bfc_ref,
                     wfc2_ref, bfc2_ref,
                     o_ref):
        x = x_ref[0]                                  # (T, C) f32
        T, C = x.shape

        # ---------------- ln_1 + causal multi-head attention ----------------
        xn = _layernorm(x, ln1_g_ref[0], ln1_b_ref[0])          # f32
        xn_b = jnp.broadcast_to(xn.astype(jnp.bfloat16), (n_head, T, C))

        # Head-batched QKV projections (scale already folded into wq/bq).
        q = jnp.einsum('htc,hcd->htd', xn_b, wq_ref[...],
                       preferred_element_type=jnp.float32) + bq_ref[...]
        k = jnp.einsum('htc,hcd->htd', xn_b, wk_ref[...],
                       preferred_element_type=jnp.float32) + bk_ref[...]
        v = jnp.einsum('htc,hcd->htd', xn_b, wv_ref[...],
                       preferred_element_type=jnp.float32) + bv_ref[...]
        q = q.astype(jnp.bfloat16)
        k = k.astype(jnp.bfloat16)
        v = v.astype(jnp.bfloat16)

        # Causal mask, built once and shared across heads.
        row = jax.lax.broadcasted_iota(jnp.int32, (T, T), 0)
        col = jax.lax.broadcasted_iota(jnp.int32, (T, T), 1)
        causal = (col <= row)[None, :, :]

        att = jnp.einsum('htd,hsd->hts', q, k,
                         preferred_element_type=jnp.float32)    # (H, T, T)
        att = jnp.where(causal, att, -jnp.inf)
        att = att - jnp.max(att, axis=-1, keepdims=True)
        p = jnp.exp(att)
        p = p * pl.reciprocal(jnp.sum(p, axis=-1, keepdims=True), approx=True)
        # TODO(synk): attention dropout is identity here (eval mode / p=0).

        y = jnp.einsum('hts,hsd->htd', p.astype(jnp.bfloat16), v,
                       preferred_element_type=jnp.float32)      # (H, T, hs)

        # Output projection: per-head partial projection summed over heads
        # (== concat(heads) @ W_proj, without any in-kernel reshape).
        y = jnp.einsum('htd,hdc->htc', y.astype(jnp.bfloat16), wproj_ref[...],
                       preferred_element_type=jnp.float32)      # (H, T, C)
        y = jnp.sum(y, axis=0) + bproj_ref[0]                   # (T, C)
        x1 = x + y                                              # residual 1

        # ---------------- ln_2 + feed-forward ----------------
        x2n = _layernorm(x1, ln2_g_ref[0], ln2_b_ref[0]).astype(jnp.bfloat16)
        h = jnp.dot(x2n, wfc_ref[...],
                    preferred_element_type=jnp.float32) + bfc_ref[0]
        h = jnp.maximum(h, 0.0).astype(jnp.bfloat16)            # ReLU
        ff = jnp.dot(h, wfc2_ref[...],
                     preferred_element_type=jnp.float32) + bfc2_ref[0]
        # TODO(synk): FFN dropout is identity here (eval mode / p=0).

        o_ref[0] = x1 + ff                                      # residual 2
    return block_kernel


def block_forward(x, params, n_head):
    (ln1_g, ln1_b, w_attn, b_attn, w_proj, b_proj,
     ln2_g, ln2_b, w_fc, b_fc, w_fc2, b_fc2) = params
    B, T, C = x.shape
    hs = C // n_head
    scale = 1.0 / math.sqrt(hs)
    bf16 = jnp.bfloat16

    # ---- host-side weight prep: per-head layouts, bf16, folded scale ----
    def split_w(w):  # (C, C) -> (n_head, C, hs)
        return jnp.transpose(w.reshape(C, n_head, hs), (1, 0, 2))

    wq = (split_w(w_attn[:, 0 * C:1 * C]) * scale).astype(bf16)
    wk = split_w(w_attn[:, 1 * C:2 * C]).astype(bf16)
    wv = split_w(w_attn[:, 2 * C:3 * C]).astype(bf16)
    bq = (b_attn[0, 0 * C:1 * C].reshape(n_head, 1, hs) * scale).astype(jnp.float32)
    bk = b_attn[0, 1 * C:2 * C].reshape(n_head, 1, hs).astype(jnp.float32)
    bv = b_attn[0, 2 * C:3 * C].reshape(n_head, 1, hs).astype(jnp.float32)
    wproj_h = w_proj.reshape(n_head, hs, C).astype(bf16)
    w_fc_b = w_fc.astype(bf16)
    w_fc2_b = w_fc2.astype(bf16)

    inputs = (x, ln1_g, ln1_b, wq, wk, wv, bq, bk, bv, wproj_h, b_proj,
              ln2_g, ln2_b, w_fc_b, b_fc, w_fc2_b, b_fc2)

    def rep(a):  # whole-array block, constant across the batch grid
        zeros = (0,) * a.ndim
        return pl.BlockSpec(a.shape, lambda b: zeros)

    in_specs = [pl.BlockSpec((1, T, C), lambda b: (b, 0, 0))] + \
               [rep(a) for a in inputs[1:]]

    return pl.pallas_call(
        make_block_kernel(n_head),
        out_shape=jax.ShapeDtypeStruct((B, T, C), jnp.float32),
        grid=(B,),
        in_specs=in_specs,
        out_specs=pl.BlockSpec((1, T, C), lambda b: (b, 0, 0)),
        compiler_params=pltpu.CompilerParams(
            dimension_semantics=("parallel",),
            vmem_limit_bytes=64 * 1024 * 1024),
    )(*inputs)


# ---------------- pure-JAX f32 reference for verification ----------------
def block_reference(x, params, n_head):
    (ln1_g, ln1_b, w_attn, b_attn, w_proj, b_proj,
     ln2_g, ln2_b, w_fc, b_fc, w_fc2, b_fc2) = params
    B, T, C = x.shape
    hs = C // n_head

    xn = _layernorm(x, ln1_g[0], ln1_b[0])
    qkv = xn @ w_attn + b_attn[0]
    q, k, v = jnp.split(qkv, 3, axis=-1)
    q = q.reshape(B, T, n_head, hs).transpose(0, 2, 1, 3)
    k = k.reshape(B, T, n_head, hs).transpose(0, 2, 1, 3)
    v = v.reshape(B, T, n_head, hs).transpose(0, 2, 1, 3)
    att = (q @ k.transpose(0, 1, 3, 2)) / math.sqrt(hs)
    mask = jnp.tril(jnp.ones((T, T), dtype=bool))
    att = jnp.where(mask[None, None], att, -jnp.inf)
    att = jax.nn.softmax(att, axis=-1)
    y = (att @ v).transpose(0, 2, 1, 3).reshape(B, T, C)
    y = y @ w_proj + b_proj[0]
    x1 = x + y

    x2n = _layernorm(x1, ln2_g[0], ln2_b[0])
    h = jnp.maximum(x2n @ w_fc + b_fc[0], 0.0)
    ff = h @ w_fc2 + b_fc2[0]
    return x1 + ff


if __name__ == "__main__":
    # small config: batch=2, block_size (seq) = 8, n_embd=32, n_head=4, dropout=0
    B, T, C, n_head = 2, 8, 32, 4
    H = 4 * C

    key = jax.random.PRNGKey(0)
    ks = jax.random.split(key, 12)

    ln1_g = 1.0 + 0.1 * jax.random.normal(ks[0], (1, C), jnp.float32)
    ln1_b = 0.1 * jax.random.normal(ks[1], (1, C), jnp.float32)
    w_attn = 0.05 * jax.random.normal(ks[2], (C, 3 * C), jnp.float32)
    b_attn = 0.02 * jax.random.normal(ks[3], (1, 3 * C), jnp.float32)
    w_proj = 0.05 * jax.random.normal(ks[4], (C, C), jnp.float32)
    b_proj = 0.02 * jax.random.normal(ks[5], (1, C), jnp.float32)
    ln2_g = 1.0 + 0.1 * jax.random.normal(ks[6], (1, C), jnp.float32)
    ln2_b = 0.1 * jax.random.normal(ks[7], (1, C), jnp.float32)
    w_fc = 0.05 * jax.random.normal(ks[8], (C, H), jnp.float32)
    b_fc = 0.02 * jax.random.normal(ks[9], (1, H), jnp.float32)
    w_fc2 = 0.05 * jax.random.normal(ks[10], (H, C), jnp.float32)
    b_fc2 = 0.02 * jax.random.normal(ks[11], (1, C), jnp.float32)

    params = (ln1_g, ln1_b, w_attn, b_attn, w_proj, b_proj,
              ln2_g, ln2_b, w_fc, b_fc, w_fc2, b_fc2)

    x = jax.random.normal(jax.random.PRNGKey(42), (B, T, C), jnp.float32)

    out = block_forward(x, params, n_head)
    out = jax.block_until_ready(out)

    ref = block_reference(x, params, n_head)
    assert out.shape == (B, T, C)
    # bf16 matmul inputs (f32 accumulation) -> looser tolerance vs f32 ref.
    assert jnp.allclose(out, ref, atol=2e-2, rtol=2e-2), \
        f"max err {jnp.max(jnp.abs(out - ref))}"

    print("KERNEL_OK")
</pallas_src>

<mosaic_0001>
module attributes {stable_mosaic.version = 11 : i64} {
  func.func @block_kernel(%arg0: i32, %arg1: memref<1x8x32xf32, #tpu.memory_space<vmem>>, %arg2: memref<1x32xf32, #tpu.memory_space<vmem>>, %arg3: memref<1x32xf32, #tpu.memory_space<vmem>>, %arg4: memref<4x32x8xbf16, #tpu.memory_space<vmem>>, %arg5: memref<4x32x8xbf16, #tpu.memory_space<vmem>>, %arg6: memref<4x32x8xbf16, #tpu.memory_space<vmem>>, %arg7: memref<4x1x8xf32, #tpu.memory_space<vmem>>, %arg8: memref<4x1x8xf32, #tpu.memory_space<vmem>>, %arg9: memref<4x1x8xf32, #tpu.memory_space<vmem>>, %arg10: memref<4x8x32xbf16, #tpu.memory_space<vmem>>, %arg11: memref<1x32xf32, #tpu.memory_space<vmem>>, %arg12: memref<1x32xf32, #tpu.memory_space<vmem>>, %arg13: memref<1x32xf32, #tpu.memory_space<vmem>>, %arg14: memref<32x128xbf16, #tpu.memory_space<vmem>>, %arg15: memref<1x128xf32, #tpu.memory_space<vmem>>, %arg16: memref<128x32xbf16, #tpu.memory_space<vmem>>, %arg17: memref<1x32xf32, #tpu.memory_space<vmem>>, %arg18: memref<1x8x32xf32, #tpu.memory_space<vmem>>) attributes {dimension_semantics = [#tpu.dimension_semantics<parallel>], iteration_bounds = array<i64: 2>, scalar_prefetch = 0 : i64, scratch_operands = 0 : i64, tpu.core_type = #tpu.core_type<tc>, window_params = [{transform_indices = @transform_0, window_bounds = array<i64: 1, 8, 32>}, {pipeline_mode = #tpu.pipeline_mode<synchronous>, transform_indices = @transform_1, window_bounds = array<i64: 1, 32>}, {pipeline_mode = #tpu.pipeline_mode<synchronous>, transform_indices = @transform_2, window_bounds = array<i64: 1, 32>}, {pipeline_mode = #tpu.pipeline_mode<synchronous>, transform_indices = @transform_3, window_bounds = array<i64: 4, 32, 8>}, {pipeline_mode = #tpu.pipeline_mode<synchronous>, transform_indices = @transform_4, window_bounds = array<i64: 4, 32, 8>}, {pipeline_mode = #tpu.pipeline_mode<synchronous>, transform_indices = @transform_5, window_bounds = array<i64: 4, 32, 8>}, {pipeline_mode = #tpu.pipeline_mode<synchronous>, transform_indices = @transform_6, window_bounds = array<i64: 4, 1, 8>}, {pipeline_mode = #tpu.pipeline_mode<synchronous>, transform_indices = @transform_7, window_bounds = array<i64: 4, 1, 8>}, {pipeline_mode = #tpu.pipeline_mode<synchronous>, transform_indices = @transform_8, window_bounds = array<i64: 4, 1, 8>}, {pipeline_mode = #tpu.pipeline_mode<synchronous>, transform_indices = @transform_9, window_bounds = array<i64: 4, 8, 32>}, {pipeline_mode = #tpu.pipeline_mode<synchronous>, transform_indices = @transform_10, window_bounds = array<i64: 1, 32>}, {pipeline_mode = #tpu.pipeline_mode<synchronous>, transform_indices = @transform_11, window_bounds = array<i64: 1, 32>}, {pipeline_mode = #tpu.pipeline_mode<synchronous>, transform_indices = @transform_12, window_bounds = array<i64: 1, 32>}, {pipeline_mode = #tpu.pipeline_mode<synchronous>, transform_indices = @transform_13, window_bounds = array<i64: 32, 128>}, {pipeline_mode = #tpu.pipeline_mode<synchronous>, transform_indices = @transform_14, window_bounds = array<i64: 1, 128>}, {pipeline_mode = #tpu.pipeline_mode<synchronous>, transform_indices = @transform_15, window_bounds = array<i64: 128, 32>}, {pipeline_mode = #tpu.pipeline_mode<synchronous>, transform_indices = @transform_16, window_bounds = array<i64: 1, 32>}, {transform_indices = @transform_17, window_bounds = array<i64: 1, 8, 32>}]} {
    %c0 = arith.constant 0 : index
    %c0_0 = arith.constant 0 : index
    %c0_1 = arith.constant 0 : index
    %0 = vector.load %arg1[%c0, %c0_0, %c0_1] : memref<1x8x32xf32, #tpu.memory_space<vmem>>, vector<1x8x32xf32>
    %1 = vector.shape_cast %0 : vector<1x8x32xf32> to vector<8x32xf32>
    %c0_2 = arith.constant 0 : index
    %c0_3 = arith.constant 0 : index
    %2 = vector.load %arg2[%c0_2, %c0_3] : memref<1x32xf32, #tpu.memory_space<vmem>>, vector<1x32xf32>
    %3 = vector.shape_cast %2 : vector<1x32xf32> to vector<32xf32>
    %c0_4 = arith.constant 0 : index
    %c0_5 = arith.constant 0 : index
    %4 = vector.load %arg3[%c0_4, %c0_5] : memref<1x32xf32, #tpu.memory_space<vmem>>, vector<1x32xf32>
    %5 = vector.shape_cast %4 : vector<1x32xf32> to vector<32xf32>
    %cst = arith.constant dense<0.000000e+00> : vector<8xf32>
    %6 = vector.multi_reduction <add>, %1, %cst [1] : vector<8x32xf32> to vector<8xf32>
    %7 = vector.shape_cast %6 : vector<8xf32> to vector<8x1xf32>
    %cst_6 = arith.constant 3.200000e+01 : f32
    %8 = vector.broadcast %cst_6 : f32 to vector<8x1xf32>
    %9 = arith.divf %7, %8 : vector<8x1xf32>
    %10 = vector.broadcast %9 : vector<8x1xf32> to vector<8x32xf32>
    %11 = arith.subf %1, %10 : vector<8x32xf32>
    %12 = arith.mulf %11, %11 : vector<8x32xf32>
    %cst_7 = arith.constant dense<0.000000e+00> : vector<8xf32>
    %13 = vector.multi_reduction <add>, %12, %cst_7 [1] : vector<8x32xf32> to vector<8xf32>
    %14 = vector.shape_cast %13 : vector<8xf32> to vector<8x1xf32>
    %cst_8 = arith.constant 3.200000e+01 : f32
    %15 = vector.broadcast %cst_8 : f32 to vector<8x1xf32>
    %16 = arith.divf %14, %15 : vector<8x1xf32>
    %17 = vector.broadcast %9 : vector<8x1xf32> to vector<8x32xf32>
    %18 = arith.subf %1, %17 : vector<8x32xf32>
    %cst_9 = arith.constant 9.99999974E-6 : f32
    %19 = vector.broadcast %cst_9 : f32 to vector<8x1xf32>
    %20 = arith.addf %16, %19 : vector<8x1xf32>
    %21 = math.rsqrt %20 : vector<8x1xf32>
    %22 = vector.broadcast %21 : vector<8x1xf32> to vector<8x32xf32>
    %23 = arith.mulf %18, %22 : vector<8x32xf32>
    %24 = vector.shape_cast %3 : vector<32xf32> to vector<1x32xf32>
    %25 = vector.broadcast %24 : vector<1x32xf32> to vector<8x32xf32>
    %26 = arith.mulf %23, %25 : vector<8x32xf32>
    %27 = vector.shape_cast %5 : vector<32xf32> to vector<1x32xf32>
    %28 = vector.broadcast %27 : vector<1x32xf32> to vector<8x32xf32>
    %29 = arith.addf %26, %28 : vector<8x32xf32>
    %30 = arith.truncf %29 : vector<8x32xf32> to vector<8x32xbf16>
    %31 = vector.shape_cast %30 : vector<8x32xbf16> to vector<1x8x32xbf16>
    %32 = vector.broadcast %31 : vector<1x8x32xbf16> to vector<4x8x32xbf16>
    %c0_10 = arith.constant 0 : index
    %c0_11 = arith.constant 0 : index
    %c0_12 = arith.constant 0 : index
    %33 = vector.load %arg4[%c0_10, %c0_11, %c0_12] : memref<4x32x8xbf16, #tpu.memory_space<vmem>>, vector<4x32x8xbf16>
    "tpu.trace_start"() <{level = 10 : i32, message = "htc,hcd->htd"}> : () -> ()
    %cst_13 = arith.constant dense<0.000000e+00> : vector<4x8x8xf32>
    %34 = tpu.matmul %32, %33, %cst_13 {dimension_numbers = #tpu.dot_dimension_numbers<[2], [1], [1], [2], [0, 0, 0, 1, 1, 2], [0], [0]>} : vector<4x8x32xbf16>, vector<4x32x8xbf16>, vector<4x8x8xf32> -> vector<4x8x8xf32>
    "tpu.trace_stop"() : () -> ()
    %c0_14 = arith.constant 0 : index
    %c0_15 = arith.constant 0 : index
    %c0_16 = arith.constant 0 : index
    %35 = vector.load %arg7[%c0_14, %c0_15, %c0_16] : memref<4x1x8xf32, #tpu.memory_space<vmem>>, vector<4x1x8xf32>
    %36 = vector.broadcast %35 : vector<4x1x8xf32> to vector<4x8x8xf32>
    %37 = arith.addf %34, %36 : vector<4x8x8xf32>
    %c0_17 = arith.constant 0 : index
    %c0_18 = arith.constant 0 : index
    %c0_19 = arith.constant 0 : index
    %38 = vector.load %arg5[%c0_17, %c0_18, %c0_19] : memref<4x32x8xbf16, #tpu.memory_space<vmem>>, vector<4x32x8xbf16>
    "tpu.trace_start"() <{level = 10 : i32, message = "htc,hcd->htd"}> : () -> ()
    %cst_20 = arith.constant dense<0.000000e+00> : vector<4x8x8xf32>
    %39 = tpu.matmul %32, %38, %cst_20 {dimension_numbers = #tpu.dot_dimension_numbers<[2], [1], [1], [2], [0, 0, 0, 1, 1, 2], [0], [0]>} : vector<4x8x32xbf16>, vector<4x32x8xbf16>, vector<4x8x8xf32> -> vector<4x8x8xf32>
    "tpu.trace_stop"() : () -> ()
    %c0_21 = arith.constant 0 : index
    %c0_22 = arith.constant 0 : index
    %c0_23 = arith.constant 0 : index
    %40 = vector.load %arg8[%c0_21, %c0_22, %c0_23] : memref<4x1x8xf32, #tpu.memory_space<vmem>>, vector<4x1x8xf32>
    %41 = vector.broadcast %40 : vector<4x1x8xf32> to vector<4x8x8xf32>
    %42 = arith.addf %39, %41 : vector<4x8x8xf32>
    %c0_24 = arith.constant 0 : index
    %c0_25 = arith.constant 0 : index
    %c0_26 = arith.constant 0 : index
    %43 = vector.load %arg6[%c0_24, %c0_25, %c0_26] : memref<4x32x8xbf16, #tpu.memory_space<vmem>>, vector<4x32x8xbf16>
    "tpu.trace_start"() <{level = 10 : i32, message = "htc,hcd->htd"}> : () -> ()
    %cst_27 = arith.constant dense<0.000000e+00> : vector<4x8x8xf32>
    %44 = tpu.matmul %32, %43, %cst_27 {dimension_numbers = #tpu.dot_dimension_numbers<[2], [1], [1], [2], [0, 0, 0, 1, 1, 2], [0], [0]>} : vector<4x8x32xbf16>, vector<4x32x8xbf16>, vector<4x8x8xf32> -> vector<4x8x8xf32>
    "tpu.trace_stop"() : () -> ()
    %c0_28 = arith.constant 0 : index
    %c0_29 = arith.constant 0 : index
    %c0_30 = arith.constant 0 : index
    %45 = vector.load %arg9[%c0_28, %c0_29, %c0_30] : memref<4x1x8xf32, #tpu.memory_space<vmem>>, vector<4x1x8xf32>
    %46 = vector.broadcast %45 : vector<4x1x8xf32> to vector<4x8x8xf32>
    %47 = arith.addf %44, %46 : vector<4x8x8xf32>
    %48 = arith.truncf %37 : vector<4x8x8xf32> to vector<4x8x8xbf16>
    %49 = arith.truncf %42 : vector<4x8x8xf32> to vector<4x8x8xbf16>
    %50 = arith.truncf %47 : vector<4x8x8xf32> to vector<4x8x8xbf16>
    %51 = tpu.iota {dimensions = array<i32: 0>} : vector<8x8xi32>
    %52 = tpu.iota {dimensions = array<i32: 1>} : vector<8x8xi32>
    %53 = arith.cmpi sle, %52, %51 : vector<8x8xi32>
    %54 = vector.shape_cast %53 : vector<8x8xi1> to vector<1x8x8xi1>
    "tpu.trace_start"() <{level = 10 : i32, message = "htd,hsd->hts"}> : () -> ()
    %cst_31 = arith.constant dense<0.000000e+00> : vector<4x8x8xf32>
    %55 = tpu.matmul %48, %49, %cst_31 {dimension_numbers = #tpu.dot_dimension_numbers<[2], [2], [1], [1], [0, 0, 0, 1, 1, 1], [0], [0]>} : vector<4x8x8xbf16>, vector<4x8x8xbf16>, vector<4x8x8xf32> -> vector<4x8x8xf32>
    %cst_32 = arith.constant 0xFF800000 : f32
    "tpu.trace_stop"() : () -> ()
    %56 = vector.shape_cast %54 : vector<1x8x8xi1> to vector<1x8x8xi1>
    %57 = vector.broadcast %56 : vector<1x8x8xi1> to vector<4x8x8xi1>
    %58 = vector.broadcast %cst_32 : f32 to vector<4x8x8xf32>
    %59 = arith.select %57, %55, %58 : vector<4x8x8xi1>, vector<4x8x8xf32>
    %cst_33 = arith.constant dense<0xFF800000> : vector<4x8xf32>
    %60 = vector.multi_reduction <maximumf>, %59, %cst_33 [2] : vector<4x8x8xf32> to vector<4x8xf32>
    %61 = vector.shape_cast %60 : vector<4x8xf32> to vector<4x8x1xf32>
    %62 = vector.broadcast %61 : vector<4x8x1xf32> to vector<4x8x8xf32>
    %63 = arith.subf %59, %62 : vector<4x8x8xf32>
    %64 = math.exp %63 : vector<4x8x8xf32>
    %cst_34 = arith.constant dense<0.000000e+00> : vector<4x8xf32>
    %65 = vector.multi_reduction <add>, %64, %cst_34 [2] : vector<4x8x8xf32> to vector<4x8xf32>
    %66 = vector.shape_cast %65 : vector<4x8xf32> to vector<4x8x1xf32>
    %67 = tpu.reciprocal %66 {approx = true} : vector<4x8x1xf32> -> vector<4x8x1xf32>
    %68 = vector.broadcast %67 : vector<4x8x1xf32> to vector<4x8x8xf32>
    %69 = arith.mulf %64, %68 : vector<4x8x8xf32>
    %70 = arith.truncf %69 : vector<4x8x8xf32> to vector<4x8x8xbf16>
    "tpu.trace_start"() <{level = 10 : i32, message = "hts,hsd->htd"}> : () -> ()
    %cst_35 = arith.constant dense<0.000000e+00> : vector<4x8x8xf32>
    %71 = tpu.matmul %70, %50, %cst_35 {dimension_numbers = #tpu.dot_dimension_numbers<[2], [1], [1], [2], [0, 0, 0, 1, 1, 2], [0], [0]>} : vector<4x8x8xbf16>, vector<4x8x8xbf16>, vector<4x8x8xf32> -> vector<4x8x8xf32>
    "tpu.trace_stop"() : () -> ()
    %72 = arith.truncf %71 : vector<4x8x8xf32> to vector<4x8x8xbf16>
    %c0_36 = arith.constant 0 : index
    %c0_37 = arith.constant 0 : index
    %c0_38 = arith.constant 0 : index
    %73 = vector.load %arg10[%c0_36, %c0_37, %c0_38] : memref<4x8x32xbf16, #tpu.memory_space<vmem>>, vector<4x8x32xbf16>
    "tpu.trace_start"() <{level = 10 : i32, message = "htd,hdc->htc"}> : () -> ()
    %cst_39 = arith.constant dense<0.000000e+00> : vector<4x8x32xf32>
    %74 = tpu.matmul %72, %73, %cst_39 {dimension_numbers = #tpu.dot_dimension_numbers<[2], [1], [1], [2], [0, 0, 0, 1, 1, 2], [0], [0]>} : vector<4x8x8xbf16>, vector<4x8x32xbf16>, vector<4x8x32xf32> -> vector<4x8x32xf32>
    "tpu.trace_stop"() : () -> ()
    %cst_40 = arith.constant dense<0.000000e+00> : vector<8x32xf32>
    %75 = vector.multi_reduction <add>, %74, %cst_40 [0] : vector<4x8x32xf32> to vector<8x32xf32>
    %c0_41 = arith.constant 0 : index
    %c0_42 = arith.constant 0 : index
    %76 = vector.load %arg11[%c0_41, %c0_42] : memref<1x32xf32, #tpu.memory_space<vmem>>, vector<1x32xf32>
    %77 = vector.shape_cast %76 : vector<1x32xf32> to vector<32xf32>
    %78 = vector.shape_cast %77 : vector<32xf32> to vector<1x32xf32>
    %79 = vector.broadcast %78 : vector<1x32xf32> to vector<8x32xf32>
    %80 = arith.addf %75, %79 : vector<8x32xf32>
    %81 = arith.addf %1, %80 : vector<8x32xf32>
    %c0_43 = arith.constant 0 : index
    %c0_44 = arith.constant 0 : index
    %82 = vector.load %arg12[%c0_43, %c0_44] : memref<1x32xf32, #tpu.memory_space<vmem>>, vector<1x32xf32>
    %83 = vector.shape_cast %82 : vector<1x32xf32> to vector<32xf32>
    %c0_45 = arith.constant 0 : index
    %c0_46 = arith.constant 0 : index
    %84 = vector.load %arg13[%c0_45, %c0_46] : memref<1x32xf32, #tpu.memory_space<vmem>>, vector<1x32xf32>
    %85 = vector.shape_cast %84 : vector<1x32xf32> to vector<32xf32>
    %cst_47 = arith.constant dense<0.000000e+00> : vector<8xf32>
    %86 = vector.multi_reduction <add>, %81, %cst_47 [1] : vector<8x32xf32> to vector<8xf32>
    %87 = vector.shape_cast %86 : vector<8xf32> to vector<8x1xf32>
    %cst_48 = arith.constant 3.200000e+01 : f32
    %88 = vector.broadcast %cst_48 : f32 to vector<8x1xf32>
    %89 = arith.divf %87, %88 : vector<8x1xf32>
    %90 = vector.broadcast %89 : vector<8x1xf32> to vector<8x32xf32>
    %91 = arith.subf %81, %90 : vector<8x32xf32>
    %92 = arith.mulf %91, %91 : vector<8x32xf32>
    %cst_49 = arith.constant dense<0.000000e+00> : vector<8xf32>
    %93 = vector.multi_reduction <add>, %92, %cst_49 [1] : vector<8x32xf32> to vector<8xf32>
    %94 = vector.shape_cast %93 : vector<8xf32> to vector<8x1xf32>
    %cst_50 = arith.constant 3.200000e+01 : f32
    %95 = vector.broadcast %cst_50 : f32 to vector<8x1xf32>
    %96 = arith.divf %94, %95 : vector<8x1xf32>
    %97 = vector.broadcast %89 : vector<8x1xf32> to vector<8x32xf32>
    %98 = arith.subf %81, %97 : vector<8x32xf32>
    %cst_51 = arith.constant 9.99999974E-6 : f32
    %99 = vector.broadcast %cst_51 : f32 to vector<8x1xf32>
    %100 = arith.addf %96, %99 : vector<8x1xf32>
    %101 = math.rsqrt %100 : vector<8x1xf32>
    %102 = vector.broadcast %101 : vector<8x1xf32> to vector<8x32xf32>
    %103 = arith.mulf %98, %102 : vector<8x32xf32>
    %104 = vector.shape_cast %83 : vector<32xf32> to vector<1x32xf32>
    %105 = vector.broadcast %104 : vector<1x32xf32> to vector<8x32xf32>
    %106 = arith.mulf %103, %105 : vector<8x32xf32>
    %107 = vector.shape_cast %85 : vector<32xf32> to vector<1x32xf32>
    %108 = vector.broadcast %107 : vector<1x32xf32> to vector<8x32xf32>
    %109 = arith.addf %106, %108 : vector<8x32xf32>
    %110 = arith.truncf %109 : vector<8x32xf32> to vector<8x32xbf16>
    %c0_52 = arith.constant 0 : index
    %c0_53 = arith.constant 0 : index
    %111 = vector.load %arg14[%c0_52, %c0_53] : memref<32x128xbf16, #tpu.memory_space<vmem>>, vector<32x128xbf16>
    %cst_54 = arith.constant dense<0.000000e+00> : vector<8x128xf32>
    %112 = tpu.matmul %110, %111, %cst_54 {dimension_numbers = #tpu.dot_dimension_numbers<[1], [0], [0], [1], [0, 0, 1, 1], [], []>} : vector<8x32xbf16>, vector<32x128xbf16>, vector<8x128xf32> -> vector<8x128xf32>
    %c0_55 = arith.constant 0 : index
    %c0_56 = arith.constant 0 : index
    %113 = vector.load %arg15[%c0_55, %c0_56] : memref<1x128xf32, #tpu.memory_space<vmem>>, vector<1x128xf32>
    %114 = vector.shape_cast %113 : vector<1x128xf32> to vector<128xf32>
    %115 = vector.shape_cast %114 : vector<128xf32> to vector<1x128xf32>
    %116 = vector.broadcast %115 : vector<1x128xf32> to vector<8x128xf32>
    %117 = arith.addf %112, %116 : vector<8x128xf32>
    %cst_57 = arith.constant 0.000000e+00 : f32
    %118 = vector.broadcast %cst_57 : f32 to vector<8x128xf32>
    %119 = arith.maximumf %117, %118 : vector<8x128xf32>
    %120 = arith.truncf %119 : vector<8x128xf32> to vector<8x128xbf16>
    %c0_58 = arith.constant 0 : index
    %c0_59 = arith.constant 0 : index
    %121 = vector.load %arg16[%c0_58, %c0_59] : memref<128x32xbf16, #tpu.memory_space<vmem>>, vector<128x32xbf16>
    %cst_60 = arith.constant dense<0.000000e+00> : vector<8x32xf32>
    %122 = tpu.matmul %120, %121, %cst_60 {dimension_numbers = #tpu.dot_dimension_numbers<[1], [0], [0], [1], [0, 0, 1, 1], [], []>} : vector<8x128xbf16>, vector<128x32xbf16>, vector<8x32xf32> -> vector<8x32xf32>
    %c0_61 = arith.constant 0 : index
    %c0_62 = arith.constant 0 : index
    %123 = vector.load %arg17[%c0_61, %c0_62] : memref<1x32xf32, #tpu.memory_space<vmem>>, vector<1x32xf32>
    %124 = vector.shape_cast %123 : vector<1x32xf32> to vector<32xf32>
    %125 = vector.shape_cast %124 : vector<32xf32> to vector<1x32xf32>
    %126 = vector.broadcast %125 : vector<1x32xf32> to vector<8x32xf32>
    %127 = arith.addf %122, %126 : vector<8x32xf32>
    %128 = arith.addf %81, %127 : vector<8x32xf32>
    %c0_63 = arith.constant 0 : index
    %c0_64 = arith.constant 0 : index
    %c0_65 = arith.constant 0 : index
    %129 = vector.load %arg18[%c0_63, %c0_64, %c0_65] : memref<1x8x32xf32, #tpu.memory_space<vmem>>, vector<1x8x32xf32>
    %130 = vector.shape_cast %129 : vector<1x8x32xf32> to vector<8x32xf32>
    %131 = vector.shape_cast %128 : vector<8x32xf32> to vector<1x8x32xf32>
    tpu.vector_store %arg18[%c0_63, %c0_64, %c0_65], %131 {strides = array<i32>} : memref<1x8x32xf32, #tpu.memory_space<vmem>>, vector<1x8x32xf32>,
    return
  }
  func.func @transform_0(%arg0: i32) -> (i32, i32, i32) {
    %c0_i32 = arith.constant 0 : i32
    %c0_i32_0 = arith.constant 0 : i32
    %c0_i32_1 = arith.constant 0 : i32
    return %arg0, %c0_i32, %c0_i32_0 : i32, i32, i32
  }
  func.func @transform_1(%arg0: i32) -> (i32, i32) {
    %c0_i32 = arith.constant 0 : i32
    %c0_i32_0 = arith.constant 0 : i32
    %c0_i32_1 = arith.constant 0 : i32
    return %c0_i32, %c0_i32_0 : i32, i32
  }
  func.func @transform_2(%arg0: i32) -> (i32, i32) {
    %c0_i32 = arith.constant 0 : i32
    %c0_i32_0 = arith.constant 0 : i32
    %c0_i32_1 = arith.constant 0 : i32
    return %c0_i32, %c0_i32_0 : i32, i32
  }
  func.func @transform_3(%arg0: i32) -> (i32, i32, i32) {
    %c0_i32 = arith.constant 0 : i32
    %c0_i32_0 = arith.constant 0 : i32
    %c0_i32_1 = arith.constant 0 : i32
    %c0_i32_2 = arith.constant 0 : i32
    return %c0_i32, %c0_i32_0, %c0_i32_1 : i32, i32, i32
  }
  func.func @transform_4(%arg0: i32) -> (i32, i32, i32) {
    %c0_i32 = arith.constant 0 : i32
    %c0_i32_0 = arith.constant 0 : i32
    %c0_i32_1 = arith.constant 0 : i32
    %c0_i32_2 = arith.constant 0 : i32
    return %c0_i32, %c0_i32_0, %c0_i32_1 : i32, i32, i32
  }
  func.func @transform_5(%arg0: i32) -> (i32, i32, i32) {
    %c0_i32 = arith.constant 0 : i32
    %c0_i32_0 = arith.constant 0 : i32
    %c0_i32_1 = arith.constant 0 : i32
    %c0_i32_2 = arith.constant 0 : i32
    return %c0_i32, %c0_i32_0, %c0_i32_1 : i32, i32, i32
  }
  func.func @transform_6(%arg0: i32) -> (i32, i32, i32) {
    %c0_i32 = arith.constant 0 : i32
    %c0_i32_0 = arith.constant 0 : i32
    %c0_i32_1 = arith.constant 0 : i32
    %c0_i32_2 = arith.constant 0 : i32
    return %c0_i32, %c0_i32_0, %c0_i32_1 : i32, i32, i32
  }
  func.func @transform_7(%arg0: i32) -> (i32, i32, i32) {
    %c0_i32 = arith.constant 0 : i32
    %c0_i32_0 = arith.constant 0 : i32
    %c0_i32_1 = arith.constant 0 : i32
    %c0_i32_2 = arith.constant 0 : i32
    return %c0_i32, %c0_i32_0, %c0_i32_1 : i32, i32, i32
  }
  func.func @transform_8(%arg0: i32) -> (i32, i32, i32) {
    %c0_i32 = arith.constant 0 : i32
    %c0_i32_0 = arith.constant 0 : i32
    %c0_i32_1 = arith.constant 0 : i32
    %c0_i32_2 = arith.constant 0 : i32
    return %c0_i32, %c0_i32_0, %c0_i32_1 : i32, i32, i32
  }
  func.func @transform_9(%arg0: i32) -> (i32, i32, i32) {
    %c0_i32 = arith.constant 0 : i32
    %c0_i32_0 = arith.constant 0 : i32
    %c0_i32_1 = arith.constant 0 : i32
    %c0_i32_2 = arith.constant 0 : i32
    return %c0_i32, %c0_i32_0, %c0_i32_1 : i32, i32, i32
  }
  func.func @transform_10(%arg0: i32) -> (i32, i32) {
    %c0_i32 = arith.constant 0 : i32
    %c0_i32_0 = arith.constant 0 : i32
    %c0_i32_1 = arith.constant 0 : i32
    return %c0_i32, %c0_i32_0 : i32, i32
  }
  func.func @transform_11(%arg0: i32) -> (i32, i32) {
    %c0_i32 = arith.constant 0 : i32
    %c0_i32_0 = arith.constant 0 : i32
    %c0_i32_1 = arith.constant 0 : i32
    return %c0_i32, %c0_i32_0 : i32, i32
  }
  func.func @transform_12(%arg0: i32) -> (i32, i32) {
    %c0_i32 = arith.constant 0 : i32
    %c0_i32_0 = arith.constant 0 : i32
    %c0_i32_1 = arith.constant 0 : i32
    return %c0_i32, %c0_i32_0 : i32, i32
  }
  func.func @transform_13(%arg0: i32) -> (i32, i32) {
    %c0_i32 = arith.constant 0 : i32
    %c0_i32_0 = arith.constant 0 : i32
    %c0_i32_1 = arith.constant 0 : i32
    return %c0_i32, %c0_i32_0 : i32, i32
  }
  func.func @transform_14(%arg0: i32) -> (i32, i32) {
    %c0_i32 = arith.constant 0 : i32
    %c0_i32_0 = arith.constant 0 : i32
    %c0_i32_1 = arith.constant 0 : i32
    return %c0_i32, %c0_i32_0 : i32, i32
  }
  func.func @transform_15(%arg0: i32) -> (i32, i32) {
    %c0_i32 = arith.constant 0 : i32
    %c0_i32_0 = arith.constant 0 : i32
    %c0_i32_1 = arith.constant 0 : i32
    return %c0_i32, %c0_i32_0 : i32, i32
  }
  func.func @transform_16(%arg0: i32) -> (i32, i32) {
    %c0_i32 = arith.constant 0 : i32
    %c0_i32_0 = arith.constant 0 : i32
    %c0_i32_1 = arith.constant 0 : i32
    return %c0_i32, %c0_i32_0 : i32, i32
  }
  func.func @transform_17(%arg0: i32) -> (i32, i32, i32) {
    %c0_i32 = arith.constant 0 : i32
    %c0_i32_0 = arith.constant 0 : i32
    %c0_i32_1 = arith.constant 0 : i32
    return %arg0, %c0_i32, %c0_i32_0 : i32, i32, i32
  }
}

</mosaic_0001>

<llo_original>
// kernel: tpu_custom_call.1
$region0: #{tpu_custom_call.1}
  #allocation0 [shape = 'u32[]', space=smem, size = 0x4, offset = 0x4, fixed_abs, tag = 'smem constant byte address 0x4 - core index']
  #allocation1 [shape = 'u32[144,128]{1,0:T(1,128)}', space=vmem, size = 0x12000, scoped, tag = 'internal scratch']
  %s0 = inlined_call_operand.hbm [shape: f32[2,8,32], index: 0, kind: input, shape index: {}]
  %s1 = inlined_call_operand.hbm [shape: f32[1,32], index: 1, kind: input, shape index: {}]
  %s2 = inlined_call_operand.hbm [shape: f32[1,32], index: 2, kind: input, shape index: {}]
  %s3 = inlined_call_operand.hbm [shape: bf16[4,32,8], index: 3, kind: input, shape index: {}]
  %s4 = inlined_call_operand.hbm [shape: bf16[4,32,8], index: 4, kind: input, shape index: {}]
  %s5 = inlined_call_operand.hbm [shape: bf16[4,32,8], index: 5, kind: input, shape index: {}]
  %s6 = inlined_call_operand.hbm [shape: f32[4,1,8], index: 6, kind: input, shape index: {}]
  %s7 = inlined_call_operand.hbm [shape: f32[4,1,8], index: 7, kind: input, shape index: {}]
  %s8 = inlined_call_operand.hbm [shape: f32[4,1,8], index: 8, kind: input, shape index: {}]
  %s9 = inlined_call_operand.hbm [shape: bf16[4,8,32], index: 9, kind: input, shape index: {}]
  %s10 = inlined_call_operand.hbm [shape: f32[1,32], index: 10, kind: input, shape index: {}]
  %s11 = inlined_call_operand.hbm [shape: f32[1,32], index: 11, kind: input, shape index: {}]
  %s12 = inlined_call_operand.hbm [shape: f32[1,32], index: 12, kind: input, shape index: {}]
  %s13 = inlined_call_operand.hbm [shape: bf16[32,128], index: 13, kind: input, shape index: {}]
  %s14 = inlined_call_operand.hbm [shape: f32[1,128], index: 14, kind: input, shape index: {}]
  %s15 = inlined_call_operand.hbm [shape: bf16[128,32], index: 15, kind: input, shape index: {}]
  %s16 = inlined_call_operand.hbm [shape: f32[1,32], index: 16, kind: input, shape index: {}]
  %s17 = inlined_call_operand.hbm [shape: f32[2,8,32], index: 17, kind: output, shape index: {}]
  %s18 = sld [smem:[#allocation0]]
  $region169: #{tpu_custom_call.1} parent=0
    _
  %s20 = ssub.s32 1, %s18
  %s21 = scalar_select 0, %s20, %s18
  $region1: #{tpu_custom_call.1} parent=0
    #allocation2 [shape = 'u8[8192]{0}', space=vmem, size = 0x2000, scoped, tag = 'input window, operand 0']
    #allocation3 [shape = 's32[2]{0}', space=sflag, size = 0x8, scoped, tag = 'scoped memory for tpu_custom_call.1']
    #allocation4 [shape = 's32[2]{0}', space=sflag, size = 0x8, scoped, tag = 'scoped memory for tpu_custom_call.1']
    #allocation5 [shape = 'u8[512]{0}', space=vmem, size = 0x400, scoped, tag = 'input window, operand 1, single buffered']
    #allocation6 [shape = 's32[1]{0}', space=sflag, size = 0x4, scoped, tag = 'scoped memory for tpu_custom_call.1']
    #allocation7 [shape = 'u8[512]{0}', space=vmem, size = 0x400, scoped, tag = 'input window, operand 2, single buffered']
    #allocation8 [shape = 'u8[32768]{0}', space=vmem, size = 0x8000, scoped, tag = 'input window, operand 3, single buffered']
    #allocation9 [shape = 's32[1]{0}', space=sflag, size = 0x4, scoped, tag = 'scoped memory for tpu_custom_call.1']
    #allocation10 [shape = 'u8[32768]{0}', space=vmem, size = 0x8000, scoped, tag = 'input window, operand 4, single buffered']
    #allocation11 [shape = 'u8[32768]{0}', space=vmem, size = 0x8000, scoped, tag = 'input window, operand 5, single buffered']
    #allocation12 [shape = 's32[1]{0}', space=sflag, size = 0x4, scoped, tag = 'scoped memory for tpu_custom_call.1']
    #allocation13 [shape = 'u8[2048]{0}', space=vmem, size = 0x800, scoped, tag = 'input window, operand 6, single buffered']
    #allocation14 [shape = 'u8[2048]{0}', space=vmem, size = 0x800, scoped, tag = 'input window, operand 7, single buffered']
    #allocation15 [shape = 's32[1]{0}', space=sflag, size = 0x4, scoped, tag = 'scoped memory for tpu_custom_call.1']
    #allocation16 [shape = 'u8[2048]{0}', space=vmem, size = 0x800, scoped, tag = 'input window, operand 8, single buffered']
    #allocation17 [shape = 'u8[8192]{0}', space=vmem, size = 0x2000, scoped, tag = 'input window, operand 9, single buffered']
    #allocation18 [shape = 's32[1]{0}', space=sflag, size = 0x4, scoped, tag = 'scoped memory for tpu_custom_call.1']
    #allocation19 [shape = 'u8[512]{0}', space=vmem, size = 0x400, scoped, tag = 'input window, operand 10, single buffered']
    #allocation20 [shape = 'u8[512]{0}', space=vmem, size = 0x400, scoped, tag = 'input window, operand 11, single buffered']
    #allocation21 [shape = 's32[1]{0}', space=sflag, size = 0x4, scoped, tag = 'scoped memory for tpu_custom_call.1']
    #allocation22 [shape = 'u8[512]{0}', space=vmem, size = 0x400, scoped, tag = 'input window, operand 12, single buffered']
    #allocation23 [shape = 'u8[8192]{0}', space=vmem, size = 0x2000, scoped, tag = 'input window, operand 13, single buffered']
    #allocation24 [shape = 's32[1]{0}', space=sflag, size = 0x4, scoped, tag = 'scoped memory for tpu_custom_call.1']
    #allocation25 [shape = 'u8[512]{0}', space=vmem, size = 0x400, scoped, tag = 'input window, operand 14, single buffered']
    #allocation26 [shape = 'u8[32768]{0}', space=vmem, size = 0x8000, scoped, tag = 'input window, operand 15, single buffered']
    #allocation27 [shape = 's32[1]{0}', space=sflag, size = 0x4, scoped, tag = 'scoped memory for tpu_custom_call.1']
    #allocation28 [shape = 'u8[512]{0}', space=vmem, size = 0x400, scoped, tag = 'input window, operand 16, single buffered']
    #allocation29 [shape = 'u8[8192]{0}', space=vmem, size = 0x2000, scoped, tag = 'output window, operand 0']
    %22 = vsyncpa [#allocation3], 0
    %s23 = scalar_lea.sflag [#allocation3], 1
    %24 = vsyncpa %s23, 0
    %25 = vsyncpa [#allocation6], 0
    %26 = vsyncpa [#allocation9], 0
    %27 = vsyncpa [#allocation12], 0
    %28 = vsyncpa [#allocation15], 0
    %29 = vsyncpa [#allocation18], 0
    %30 = vsyncpa [#allocation21], 0
    %31 = vsyncpa [#allocation24], 0
    %32 = vsyncpa [#allocation27], 0
    %33 = vsyncpa [#allocation4], 0
    %s34 = scalar_lea.sflag [#allocation4], 1
    %35 = vsyncpa %s34, 0
    loop: start=0, step=1, limit=4
    $region2: #{tpu_custom_call.1} parent=1 // loop_pre_header
      _
    $region3: #{tpu_custom_call.1} parent=1 // loop_header
      %s37 = sphi 0, %s41
      %p38 = scmp.ge.s32.totalorder %s37, 4
      %s47 = sphi 0, %s49
      %s50 = sphi 0, %s47
      %s51 = sphi 0, %s50
      %s67 = sphi 0, %s51
      %s71 = sphi 0, %s71
      %s73 = sphi 0, %s71
      %s74 = sphi 0, %s73
      %s88 = sphi 0, %s74
      %s92 = sphi 0, %s92
      %s94 = sphi 0, %s92
      %s95 = sphi 0, %s94
      %s109 = sphi 0, %s95
      %s113 = sphi 0, %s113
      %s115 = sphi 0, %s113
      %s116 = sphi 0, %s115
      %s130 = sphi 0, %s116
      %s134 = sphi 0, %s134
      %s136 = sphi 0, %s134
      %s137 = sphi 0, %s136
      %s151 = sphi 0, %s137
      %s155 = sphi 0, %s155
      %s157 = sphi 0, %s155
      %s158 = sphi 0, %s157
      %s172 = sphi 0, %s158
      %s176 = sphi 0, %s176
      %s178 = sphi 0, %s176
      %s179 = sphi 0, %s178
      %s193 = sphi 0, %s179
      %s197 = sphi 0, %s197
      %s199 = sphi 0, %s197
      %s200 = sphi 0, %s199
      %s214 = sphi 0, %s200
      %s218 = sphi 0, %s218
      %s220 = sphi 0, %s218
      %s221 = sphi 0, %s220
      %s235 = sphi 0, %s221
      %s239 = sphi 0, %s239
      %s241 = sphi 0, %s239
      %s242 = sphi 0, %s241
      %s256 = sphi 0, %s242
      %s260 = sphi 0, %s260
      %s262 = sphi 0, %s260
      %s263 = sphi 0, %s262
      %s277 = sphi 0, %s263
      %s281 = sphi 0, %s281
      %s283 = sphi 0, %s281
      %s284 = sphi 0, %s283
      %s298 = sphi 0, %s284
      %s302 = sphi 0, %s302
      %s304 = sphi 0, %s302
      %s305 = sphi 0, %s304
      %s319 = sphi 0, %s305
      %s323 = sphi 0, %s323
      %s325 = sphi 0, %s323
      %s326 = sphi 0, %s325
      %s340 = sphi 0, %s326
      %s344 = sphi 0, %s344
      %s346 = sphi 0, %s344
      %s347 = sphi 0, %s346
      %s361 = sphi 0, %s347
      %s365 = sphi 0, %s365
      %s367 = sphi 0, %s365
      %s368 = sphi 0, %s367
      %s382 = sphi 0, %s368
      %s386 = sphi 0, %s386
      %s388 = sphi 0, %s386
      %s389 = sphi 0, %s388
      %s403 = sphi 0, %s389
      %s409 = sphi 0, %s411
      %s412 = sphi 0, %s409
      %s413 = sphi 0, %s412
      %s429 = sphi 0, %s413
    $region4: #{tpu_custom_call.1} parent=1 // loop_header_branch
      %40 = sbr.rel (%p38) target = $region8
    $region5: #{tpu_custom_call.1} parent=1 // loop_body
      %s42 = ssub.s32 %s37, 1
      %s43 = ssub.s32 %s37, 2
      %s44 = sadd.s32 %s37, 1
      %s45 = ssub.s32 %s37, %s44
      %p46 = scmp.eq.s32.totalorder %s45, 0
      %s48 = sadd.s32 %s47, 1
      %s49 = scalar_select %p46, %s47, %s48
      %p52 = pneg %p46
      %p53 = scmp.eq.s32.totalorder %s37, 1
      %p54 = por %p52, %p53
      %p55 = scmp.ne.s32.totalorder %s47, %s50
      %p56 = scmp.eq.s32.totalorder %s37, 0
      %p57 = por %p55, %p56
      %p58 = scmp.ne.s32.totalorder %s47, %s50
      %p59 = scmp.eq.s32.totalorder %s42, 1
      %p60 = por %p58, %p59
      %p61 = scmp.ne.s32.totalorder %s50, %s51
      %p62 = scmp.eq.s32.totalorder %s42, 0
      %p63 = por %p61, %p62
      %p64 = scmp.ne.s32.totalorder %s50, %s51
      %p65 = scmp.eq.s32.totalorder %s43, 1
      %p66 = por %p64, %p65
      %p68 = scmp.ne.s32.totalorder %s51, %s67
      %p69 = scmp.eq.s32.totalorder %s43, 0
      %p70 = por %p68, %p69
      %s72 = sadd.s32 %s71, 1
      %p75 = scmp.eq.s32.totalorder %s37, 1
      %p76 = scmp.ne.s32.totalorder %s71, %s73
      %p77 = scmp.eq.s32.totalorder %s37, 0
      %p78 = por %p76, %p77
      %p79 = scmp.ne.s32.totalorder %s71, %s73
      %p80 = scmp.eq.s32.totalorder %s42, 1
      %p81 = por %p79, %p80
      %p82 = scmp.ne.s32.totalorder %s73, %s74
      %p83 = scmp.eq.s32.totalorder %s42, 0
      %p84 = por %p82, %p83
      %p85 = scmp.ne.s32.totalorder %s73, %s74
      %p86 = scmp.eq.s32.totalorder %s43, 1
      %p87 = por %p85, %p86
      %p89 = scmp.ne.s32.totalorder %s74, %s88
      %p90 = scmp.eq.s32.totalorder %s43, 0
      %p91 = por %p89, %p90
      %s93 = sadd.s32 %s92, 1
      %p96 = scmp.eq.s32.totalorder %s37, 1
      %p97 = scmp.ne.s32.totalorder %s92, %s94
      %p98 = scmp.eq.s32.totalorder %s37, 0
      %p99 = por %p97, %p98
      %p100 = scmp.ne.s32.totalorder %s92, %s94
      %p101 = scmp.eq.s32.totalorder %s42, 1
      %p102 = por %p100, %p101
      %p103 = scmp.ne.s32.totalorder %s94, %s95
      %p104 = scmp.eq.s32.totalorder %s42, 0
      %p105 = por %p103, %p104
      %p106 = scmp.ne.s32.totalorder %s94, %s95
      %p107 = scmp.eq.s32.totalorder %s43, 1
      %p108 = por %p106, %p107
      %p110 = scmp.ne.s32.totalorder %s95, %s109
      %p111 = scmp.eq.s32.totalorder %s43, 0
      %p112 = por %p110, %p111
      %s114 = sadd.s32 %s113, 1
      %p117 = scmp.eq.s32.totalorder %s37, 1
      %p118 = scmp.ne.s32.totalorder %s113, %s115
      %p119 = scmp.eq.s32.totalorder %s37, 0
      %p120 = por %p118, %p119
      %p121 = scmp.ne.s32.totalorder %s113, %s115
      %p122 = scmp.eq.s32.totalorder %s42, 1
      %p123 = por %p121, %p122
      %p124 = scmp.ne.s32.totalorder %s115, %s116
      %p125 = scmp.eq.s32.totalorder %s42, 0
      %p126 = por %p124, %p125
      %p127 = scmp.ne.s32.totalorder %s115, %s116
      %p128 = scmp.eq.s32.totalorder %s43, 1
      %p129 = por %p127, %p128
      %p131 = scmp.ne.s32.totalorder %s116, %s130
      %p132 = scmp.eq.s32.totalorder %s43, 0
      %p133 = por %p131, %p132
      %s135 = sadd.s32 %s134, 1
      %p138 = scmp.eq.s32.totalorder %s37, 1
      %p139 = scmp.ne.s32.totalorder %s134, %s136
      %p140 = scmp.eq.s32.totalorder %s37, 0
      %p141 = por %p139, %p140
      %p142 = scmp.ne.s32.totalorder %s134, %s136
      %p143 = scmp.eq.s32.totalorder %s42, 1
      %p144 = por %p142, %p143
      %p145 = scmp.ne.s32.totalorder %s136, %s137
      %p146 = scmp.eq.s32.totalorder %s42, 0
      %p147 = por %p145, %p146
      %p148 = scmp.ne.s32.totalorder %s136, %s137
      %p149 = scmp.eq.s32.totalorder %s43, 1
      %p150 = por %p148, %p149
      %p152 = scmp.ne.s32.totalorder %s137, %s151
      %p153 = scmp.eq.s32.totalorder %s43, 0
      %p154 = por %p152, %p153
      %s156 = sadd.s32 %s155, 1
      %p159 = scmp.eq.s32.totalorder %s37, 1
      %p160 = scmp.ne.s32.totalorder %s155, %s157
      %p161 = scmp.eq.s32.totalorder %s37, 0
      %p162 = por %p160, %p161
      %p163 = scmp.ne.s32.totalorder %s155, %s157
      %p164 = scmp.eq.s32.totalorder %s42, 1
      %p165 = por %p163, %p164
      %p166 = scmp.ne.s32.totalorder %s157, %s158
      %p167 = scmp.eq.s32.totalorder %s42, 0
      %p168 = por %p166, %p167
      %p169 = scmp.ne.s32.totalorder %s157, %s158
      %p170 = scmp.eq.s32.totalorder %s43, 1
      %p171 = por %p169, %p170
      %p173 = scmp.ne.s32.totalorder %s158, %s172
      %p174 = scmp.eq.s32.totalorder %s43, 0
      %p175 = por %p173, %p174
      %s177 = sadd.s32 %s176, 1
      %p180 = scmp.eq.s32.totalorder %s37, 1
      %p181 = scmp.ne.s32.totalorder %s176, %s178
      %p182 = scmp.eq.s32.totalorder %s37, 0
      %p183 = por %p181, %p182
      %p184 = scmp.ne.s32.totalorder %s176, %s178
      %p185 = scmp.eq.s32.totalorder %s42, 1
      %p186 = por %p184, %p185
      %p187 = scmp.ne.s32.totalorder %s178, %s179
      %p188 = scmp.eq.s32.totalorder %s42, 0
      %p189 = por %p187, %p188
      %p190 = scmp.ne.s32.totalorder %s178, %s179
      %p191 = scmp.eq.s32.totalorder %s43, 1
      %p192 = por %p190, %p191
      %p194 = scmp.ne.s32.totalorder %s179, %s193
      %p195 = scmp.eq.s32.totalorder %s43, 0
      %p196 = por %p194, %p195
      %s198 = sadd.s32 %s197, 1
      %p201 = scmp.eq.s32.totalorder %s37, 1
      %p202 = scmp.ne.s32.totalorder %s197, %s199
      %p203 = scmp.eq.s32.totalorder %s37, 0
      %p204 = por %p202, %p203
      %p205 = scmp.ne.s32.totalorder %s197, %s199
      %p206 = scmp.eq.s32.totalorder %s42, 1
      %p207 = por %p205, %p206
      %p208 = scmp.ne.s32.totalorder %s199, %s200
      %p209 = scmp.eq.s32.totalorder %s42, 0
      %p210 = por %p208, %p209
      %p211 = scmp.ne.s32.totalorder %s199, %s200
      %p212 = scmp.eq.s32.totalorder %s43, 1
      %p213 = por %p211, %p212
      %p215 = scmp.ne.s32.totalorder %s200, %s214
      %p216 = scmp.eq.s32.totalorder %s43, 0
      %p217 = por %p215, %p216
      %s219 = sadd.s32 %s218, 1
      %p222 = scmp.eq.s32.totalorder %s37, 1
      %p223 = scmp.ne.s32.totalorder %s218, %s220
      %p224 = scmp.eq.s32.totalorder %s37, 0
      %p225 = por %p223, %p224
      %p226 = scmp.ne.s32.totalorder %s218, %s220
      %p227 = scmp.eq.s32.totalorder %s42, 1
      %p228 = por %p226, %p227
      %p229 = scmp.ne.s32.totalorder %s220, %s221
      %p230 = scmp.eq.s32.totalorder %s42, 0
      %p231 = por %p229, %p230
      %p232 = scmp.ne.s32.totalorder %s220, %s221
      %p233 = scmp.eq.s32.totalorder %s43, 1
      %p234 = por %p232, %p233
      %p236 = scmp.ne.s32.totalorder %s221, %s235
      %p237 = scmp.eq.s32.totalorder %s43, 0
      %p238 = por %p236, %p237
      %s240 = sadd.s32 %s239, 1
      %p243 = scmp.eq.s32.totalorder %s37, 1
      %p244 = scmp.ne.s32.totalorder %s239, %s241
      %p245 = scmp.eq.s32.totalorder %s37, 0
      %p246 = por %p244, %p245
      %p247 = scmp.ne.s32.totalorder %s239, %s241
      %p248 = scmp.eq.s32.totalorder %s42, 1
      %p249 = por %p247, %p248
      %p250 = scmp.ne.s32.totalorder %s241, %s242
      %p251 = scmp.eq.s32.totalorder %s42, 0
      %p252 = por %p250, %p251
      %p253 = scmp.ne.s32.totalorder %s241, %s242
      %p254 = scmp.eq.s32.totalorder %s43, 1
      %p255 = por %p253, %p254
      %p257 = scmp.ne.s32.totalorder %s242, %s256
      %p258 = scmp.eq.s32.totalorder %s43, 0
      %p259 = por %p257, %p258
      %s261 = sadd.s32 %s260, 1
      %p264 = scmp.eq.s32.totalorder %s37, 1
      %p265 = scmp.ne.s32.totalorder %s260, %s262
      %p266 = scmp.eq.s32.totalorder %s37, 0
      %p267 = por %p265, %p266
      %p268 = scmp.ne.s32.totalorder %s260, %s262
      %p269 = scmp.eq.s32.totalorder %s42, 1
      %p270 = por %p268, %p269
      %p271 = scmp.ne.s32.totalorder %s262, %s263
      %p272 = scmp.eq.s32.totalorder %s42, 0
      %p273 = por %p271, %p272
      %p274 = scmp.ne.s32.totalorder %s262, %s263
      %p275 = scmp.eq.s32.totalorder %s43, 1
      %p276 = por %p274, %p275
      %p278 = scmp.ne.s32.totalorder %s263, %s277
      %p279 = scmp.eq.s32.totalorder %s43, 0
      %p280 = por %p278, %p279
      %s282 = sadd.s32 %s281, 1
      %p285 = scmp.eq.s32.totalorder %s37, 1
      %p286 = scmp.ne.s32.totalorder %s281, %s283
      %p287 = scmp.eq.s32.totalorder %s37, 0
      %p288 = por %p286, %p287
      %p289 = scmp.ne.s32.totalorder %s281, %s283
      %p290 = scmp.eq.s32.totalorder %s42, 1
      %p291 = por %p289, %p290
      %p292 = scmp.ne.s32.totalorder %s283, %s284
      %p293 = scmp.eq.s32.totalorder %s42, 0
      %p294 = por %p292, %p293
      %p295 = scmp.ne.s32.totalorder %s283, %s284
      %p296 = scmp.eq.s32.totalorder %s43, 1
      %p297 = por %p295, %p296
      %p299 = scmp.ne.s32.totalorder %s284, %s298
      %p300 = scmp.eq.s32.totalorder %s43, 0
      %p301 = por %p299, %p300
      %s303 = sadd.s32 %s302, 1
      %p306 = scmp.eq.s32.totalorder %s37, 1
      %p307 = scmp.ne.s32.totalorder %s302, %s304
      %p308 = scmp.eq.s32.totalorder %s37, 0
      %p309 = por %p307, %p308
      %p310 = scmp.ne.s32.totalorder %s302, %s304
      %p311 = scmp.eq.s32.totalorder %s42, 1
      %p312 = por %p310, %p311
      %p313 = scmp.ne.s32.totalorder %s304, %s305
      %p314 = scmp.eq.s32.totalorder %s42, 0
      %p315 = por %p313, %p314
      %p316 = scmp.ne.s32.totalorder %s304, %s305
      %p317 = scmp.eq.s32.totalorder %s43, 1
      %p318 = por %p316, %p317
      %p320 = scmp.ne.s32.totalorder %s305, %s319
      %p321 = scmp.eq.s32.totalorder %s43, 0
      %p322 = por %p320, %p321
      %s324 = sadd.s32 %s323, 1
      %p327 = scmp.eq.s32.totalorder %s37, 1
      %p328 = scmp.ne.s32.totalorder %s323, %s325
      %p329 = scmp.eq.s32.totalorder %s37, 0
      %p330 = por %p328, %p329
      %p331 = scmp.ne.s32.totalorder %s323, %s325
      %p332 = scmp.eq.s32.totalorder %s42, 1
      %p333 = por %p331, %p332
      %p334 = scmp.ne.s32.totalorder %s325, %s326
      %p335 = scmp.eq.s32.totalorder %s42, 0
      %p336 = por %p334, %p335
      %p337 = scmp.ne.s32.totalorder %s325, %s326
      %p338 = scmp.eq.s32.totalorder %s43, 1
      %p339 = por %p337, %p338
      %p341 = scmp.ne.s32.totalorder %s326, %s340
      %p342 = scmp.eq.s32.totalorder %s43, 0
      %p343 = por %p341, %p342
      %s345 = sadd.s32 %s344, 1
      %p348 = scmp.eq.s32.totalorder %s37, 1
      %p349 = scmp.ne.s32.totalorder %s344, %s346
      %p350 = scmp.eq.s32.totalorder %s37, 0
      %p351 = por %p349, %p350
      %p352 = scmp.ne.s32.totalorder %s344, %s346
      %p353 = scmp.eq.s32.totalorder %s42, 1
      %p354 = por %p352, %p353
      %p355 = scmp.ne.s32.totalorder %s346, %s347
      %p356 = scmp.eq.s32.totalorder %s42, 0
      %p357 = por %p355, %p356
      %p358 = scmp.ne.s32.totalorder %s346, %s347
      %p359 = scmp.eq.s32.totalorder %s43, 1
      %p360 = por %p358, %p359
      %p362 = scmp.ne.s32.totalorder %s347, %s361
      %p363 = scmp.eq.s32.totalorder %s43, 0
      %p364 = por %p362, %p363
      %s366 = sadd.s32 %s365, 1
      %p369 = scmp.eq.s32.totalorder %s37, 1
      %p370 = scmp.ne.s32.totalorder %s365, %s367
      %p371 = scmp.eq.s32.totalorder %s37, 0
      %p372 = por %p370, %p371
      %p373 = scmp.ne.s32.totalorder %s365, %s367
      %p374 = scmp.eq.s32.totalorder %s42, 1
      %p375 = por %p373, %p374
      %p376 = scmp.ne.s32.totalorder %s367, %s368
      %p377 = scmp.eq.s32.totalorder %s42, 0
      %p378 = por %p376, %p377
      %p379 = scmp.ne.s32.totalorder %s367, %s368
      %p380 = scmp.eq.s32.totalorder %s43, 1
      %p381 = por %p379, %p380
      %p383 = scmp.ne.s32.totalorder %s368, %s382
      %p384 = scmp.eq.s32.totalorder %s43, 0
      %p385 = por %p383, %p384
      %s387 = sadd.s32 %s386, 1
      %p390 = scmp.eq.s32.totalorder %s37, 1
      %p391 = scmp.ne.s32.totalorder %s386, %s388
      %p392 = scmp.eq.s32.totalorder %s37, 0
      %p393 = por %p391, %p392
      %p394 = scmp.ne.s32.totalorder %s386, %s388
      %p395 = scmp.eq.s32.totalorder %s42, 1
      %p396 = por %p394, %p395
      %p397 = scmp.ne.s32.totalorder %s388, %s389
      %p398 = scmp.eq.s32.totalorder %s42, 0
      %p399 = por %p397, %p398
      %p400 = scmp.ne.s32.totalorder %s388, %s389
      %p401 = scmp.eq.s32.totalorder %s43, 1
      %p402 = por %p400, %p401
      %p404 = scmp.ne.s32.totalorder %s389, %s403
      %p405 = scmp.eq.s32.totalorder %s43, 0
      %p406 = por %p404, %p405
      %s407 = ssub.s32 %s37, %s44
      %p408 = scmp.eq.s32.totalorder %s407, 0
      %s410 = sadd.s32 %s409, 1
      %s411 = scalar_select %p408, %s409, %s410
      %p414 = pneg %p408
      %p415 = scmp.eq.s32.totalorder %s37, 1
      %p416 = por %p414, %p415
      %p417 = scmp.ne.s32.totalorder %s409, %s412
      %p418 = scmp.eq.s32.totalorder %s37, 0
      %p419 = por %p417, %p418
      %p420 = scmp.ne.s32.totalorder %s409, %s412
      %p421 = scmp.eq.s32.totalorder %s42, 1
      %p422 = por %p420, %p421
      %p423 = scmp.ne.s32.totalorder %s412, %s413
      %p424 = scmp.eq.s32.totalorder %s42, 0
      %p425 = por %p423, %p424
      %p426 = scmp.ne.s32.totalorder %s412, %s413
      %p427 = scmp.eq.s32.totalorder %s43, 1
      %p428 = por %p426, %p427
      %p430 = scmp.ne.s32.totalorder %s413, %s429
      %p431 = scmp.eq.s32.totalorder %s43, 0
      %p432 = por %p430, %p431
      %p433 = scmp.le.s32.totalorder 1, %s37
      %p434 = scmp.lt.s32.totalorder %s37, 3
      %p435 = pnand %p433, %p434
      %p436 = pneg %p435
      // Predicated region
      $region9: #{tpu_custom_call.1} parent=5 // pred_check
        _
      $region10: #{tpu_custom_call.1} parent=5 // pred_check_branch
        %438 = sbr.rel (%p435) target = $region12
      $region11: #{tpu_custom_call.1} parent=5 // pred_region
        %s439 = ssub.s32 %s37, 1
        // Predicated region
        $region13: #{tpu_custom_call.1} parent=11 // pred_check
          %p440 = pneg %p84
        $region14: #{tpu_custom_call.1} parent=11 // pred_check_branch
          %442 = sbr.rel (%p440) target = $region16
        $region15: #{tpu_custom_call.1} parent=11 // pred_region
          %s444 = ssub.s32 16, 16
          %445 = vsyncadd [#allocation6], %s444
          %s447 = sshll.u32 [#allocation5], 4
          %s448 = int_to_ptr.vmem [resolvable:$true] %s447
          %450 = dma.hbm_to_vmem [thread:$0]  %s1, 16, %s448, [#allocation6]
        $region16: #{tpu_custom_call.1} parent=11 // pred_fallthru
          _
        // Predicated region
        $region17: #{tpu_custom_call.1} parent=11 // pred_check
          %p451 = pneg %p105
        $region18: #{tpu_custom_call.1} parent=11 // pred_check_branch
          %453 = sbr.rel (%p451) target = $region20
        $region19: #{tpu_custom_call.1} parent=11 // pred_region
          %s455 = ssub.s32 16, 16
          %456 = vsyncadd [#allocation6], %s455
          %s458 = sshll.u32 [#allocation7], 4
          %s459 = int_to_ptr.vmem [resolvable:$true] %s458
          %461 = dma.hbm_to_vmem [thread:$0]  %s2, 16, %s459, [#allocation6]
        $region20: #{tpu_custom_call.1} parent=11 // pred_fallthru
          _
        // Predicated region
        $region21: #{tpu_custom_call.1} parent=11 // pred_check
          %p462 = pneg %p126
        $region22: #{tpu_custom_call.1} parent=11 // pred_check_branch
          %464 = sbr.rel (%p462) target = $region24
        $region23: #{tpu_custom_call.1} parent=11 // pred_region
          %s466 = ssub.s32 1024, 1024
          %467 = vsyncadd [#allocation9], %s466
          %s468 = sshll.u32 [#allocation8], 4
          %s469 = int_to_ptr.vmem [resolvable:$true] %s468
          %474 = dma.hbm_to_vmem [thread:$0]  %s3, 1024, %s469, [#allocation9], 64, 64, 4
        $region24: #{tpu_custom_call.1} parent=11 // pred_fallthru
          _
        // Predicated region
        $region25: #{tpu_custom_call.1} parent=11 // pred_check
          %p475 = pneg %p147
        $region26: #{tpu_custom_call.1} parent=11 // pred_check_branch
          %477 = sbr.rel (%p475) target = $region28
        $region27: #{tpu_custom_call.1} parent=11 // pred_region
          %s479 = ssub.s32 1024, 1024
          %480 = vsyncadd [#allocation9], %s479
          %s481 = sshll.u32 [#allocation10], 4
          %s482 = int_to_ptr.vmem [resolvable:$true] %s481
          %487 = dma.hbm_to_vmem [thread:$0]  %s4, 1024, %s482, [#allocation9], 64, 64, 4
        $region28: #{tpu_custom_call.1} parent=11 // pred_fallthru
          _
        // Predicated region
        $region29: #{tpu_custom_call.1} parent=11 // pred_check
          %p488 = pneg %p168
        $region30: #{tpu_custom_call.1} parent=11 // pred_check_branch
          %490 = sbr.rel (%p488) target = $region32
        $region31: #{tpu_custom_call.1} parent=11 // pred_region
          %s492 = ssub.s32 1024, 1024
          %493 = vsyncadd [#allocation12], %s492
          %s494 = sshll.u32 [#allocation11], 4
          %s495 = int_to_ptr.vmem [resolvable:$true] %s494
          %500 = dma.hbm_to_vmem [thread:$0]  %s5, 1024, %s495, [#allocation12], 64, 64, 4
        $region32: #{tpu_custom_call.1} parent=11 // pred_fallthru
          _
        // Predicated region
        $region33: #{tpu_custom_call.1} parent=11 // pred_check
          %p501 = pneg %p189
        $region34: #{tpu_custom_call.1} parent=11 // pred_check_branch
          %503 = sbr.rel (%p501) target = $region36
        $region35: #{tpu_custom_call.1} parent=11 // pred_region
          %s505 = ssub.s32 64, 64
          %506 = vsyncadd [#allocation12], %s505
          %s507 = sshll.u32 [#allocation13], 4
          %s508 = int_to_ptr.vmem [resolvable:$true] %s507
          %513 = dma.hbm_to_vmem [thread:$0]  %s6, 64, %s508, [#allocation12], 16, 16, 1
        $region36: #{tpu_custom_call.1} parent=11 // pred_fallthru
          _
        // Predicated region
        $region37: #{tpu_custom_call.1} parent=11 // pred_check
          %p514 = pneg %p210
        $region38: #{tpu_custom_call.1} parent=11 // pred_check_branch
          %516 = sbr.rel (%p514) target = $region40
        $region39: #{tpu_custom_call.1} parent=11 // pred_region
          %s518 = ssub.s32 64, 64
          %519 = vsyncadd [#allocation15], %s518
          %s520 = sshll.u32 [#allocation14], 4
          %s521 = int_to_ptr.vmem [resolvable:$true] %s520
          %526 = dma.hbm_to_vmem [thread:$0]  %s7, 64, %s521, [#allocation15], 16, 16, 1
        $region40: #{tpu_custom_call.1} parent=11 // pred_fallthru
          _
        // Predicated region
        $region41: #{tpu_custom_call.1} parent=11 // pred_check
          %p527 = pneg %p231
        $region42: #{tpu_custom_call.1} parent=11 // pred_check_branch
          %529 = sbr.rel (%p527) target = $region44
        $region43: #{tpu_custom_call.1} parent=11 // pred_region
          %s531 = ssub.s32 64, 64
          %532 = vsyncadd [#allocation15], %s531
          %s533 = sshll.u32 [#allocation16], 4
          %s534 = int_to_ptr.vmem [resolvable:$true] %s533
          %539 = dma.hbm_to_vmem [thread:$0]  %s8, 64, %s534, [#allocation15], 16, 16, 1
        $region44: #{tpu_custom_call.1} parent=11 // pred_fallthru
          _
        // Predicated region
        $region45: #{tpu_custom_call.1} parent=11 // pred_check
          %p540 = pneg %p252
        $region46: #{tpu_custom_call.1} parent=11 // pred_check_branch
          %542 = sbr.rel (%p540) target = $region48
        $region47: #{tpu_custom_call.1} parent=11 // pred_region
          %s544 = ssub.s32 256, 256
          %545 = vsyncadd [#allocation18], %s544
          %s546 = sshll.u32 [#allocation17], 4
          %s547 = int_to_ptr.vmem [resolvable:$true] %s546
          %552 = dma.hbm_to_vmem [thread:$0]  %s9, 256, %s547, [#allocation18], 64, 64, 4
        $region48: #{tpu_custom_call.1} parent=11 // pred_fallthru
          _
        // Predicated region
        $region49: #{tpu_custom_call.1} parent=11 // pred_check
          %p553 = pneg %p273
        $region50: #{tpu_custom_call.1} parent=11 // pred_check_branch
          %555 = sbr.rel (%p553) target = $region52
        $region51: #{tpu_custom_call.1} parent=11 // pred_region
          %s557 = ssub.s32 16, 16
          %558 = vsyncadd [#allocation18], %s557
          %s560 = sshll.u32 [#allocation19], 4
          %s561 = int_to_ptr.vmem [resolvable:$true] %s560
          %563 = dma.hbm_to_vmem [thread:$0]  %s10, 16, %s561, [#allocation18]
        $region52: #{tpu_custom_call.1} parent=11 // pred_fallthru
          _
        // Predicated region
        $region53: #{tpu_custom_call.1} parent=11 // pred_check
          %p564 = pneg %p294
        $region54: #{tpu_custom_call.1} parent=11 // pred_check_branch
          %566 = sbr.rel (%p564) target = $region56
        $region55: #{tpu_custom_call.1} parent=11 // pred_region
          %s568 = ssub.s32 16, 16
          %569 = vsyncadd [#allocation21], %s568
          %s571 = sshll.u32 [#allocation20], 4
          %s572 = int_to_ptr.vmem [resolvable:$true] %s571
          %574 = dma.hbm_to_vmem [thread:$0]  %s11, 16, %s572, [#allocation21]
        $region56: #{tpu_custom_call.1} parent=11 // pred_fallthru
          _
        // Predicated region
        $region57: #{tpu_custom_call.1} parent=11 // pred_check
          %p575 = pneg %p315
        $region58: #{tpu_custom_call.1} parent=11 // pred_check_branch
          %577 = sbr.rel (%p575) target = $region60
        $region59: #{tpu_custom_call.1} parent=11 // pred_region
          %s579 = ssub.s32 16, 16
          %580 = vsyncadd [#allocation21], %s579
          %s582 = sshll.u32 [#allocation22], 4
          %s583 = int_to_ptr.vmem [resolvable:$true] %s582
          %585 = dma.hbm_to_vmem [thread:$0]  %s12, 16, %s583, [#allocation21]
        $region60: #{tpu_custom_call.1} parent=11 // pred_fallthru
          _
        // Predicated region
        $region61: #{tpu_custom_call.1} parent=11 // pred_check
          %p586 = pneg %p336
        $region62: #{tpu_custom_call.1} parent=11 // pred_check_branch
          %588 = sbr.rel (%p586) target = $region64
        $region63: #{tpu_custom_call.1} parent=11 // pred_region
          %s590 = ssub.s32 256, 256
          %591 = vsyncadd [#allocation24], %s590
          %s592 = sshll.u32 [#allocation23], 4
          %s593 = int_to_ptr.vmem [resolvable:$true] %s592
          %598 = dma.hbm_to_vmem [thread:$0]  %s13, 256, %s593, [#allocation24], 64, 64, 4
        $region64: #{tpu_custom_call.1} parent=11 // pred_fallthru
          _
        // Predicated region
        $region65: #{tpu_custom_call.1} parent=11 // pred_check
          %p599 = pneg %p357
        $region66: #{tpu_custom_call.1} parent=11 // pred_check_branch
          %601 = sbr.rel (%p599) target = $region68
        $region67: #{tpu_custom_call.1} parent=11 // pred_region
          %s603 = ssub.s32 16, 16
          %604 = vsyncadd [#allocation24], %s603
          %s606 = sshll.u32 [#allocation25], 4
          %s607 = int_to_ptr.vmem [resolvable:$true] %s606
          %609 = dma.hbm_to_vmem [thread:$0]  %s14, 16, %s607, [#allocation24]
        $region68: #{tpu_custom_call.1} parent=11 // pred_fallthru
          _
        // Predicated region
        $region69: #{tpu_custom_call.1} parent=11 // pred_check
          %p610 = pneg %p378
        $region70: #{tpu_custom_call.1} parent=11 // pred_check_branch
          %612 = sbr.rel (%p610) target = $region72
        $region71: #{tpu_custom_call.1} parent=11 // pred_region
          %s614 = ssub.s32 1024, 1024
          %615 = vsyncadd [#allocation27], %s614
          %s616 = sshll.u32 [#allocation26], 4
          %s617 = int_to_ptr.vmem [resolvable:$true] %s616
          %622 = dma.hbm_to_vmem [thread:$0]  %s15, 1024, %s617, [#allocation27], 64, 64, 4
        $region72: #{tpu_custom_call.1} parent=11 // pred_fallthru
          _
        // Predicated region
        $region73: #{tpu_custom_call.1} parent=11 // pred_check
          %p623 = pneg %p399
        $region74: #{tpu_custom_call.1} parent=11 // pred_check_branch
          %625 = sbr.rel (%p623) target = $region76
        $region75: #{tpu_custom_call.1} parent=11 // pred_region
          %s627 = ssub.s32 16, 16
          %628 = vsyncadd [#allocation27], %s627
          %s630 = sshll.u32 [#allocation28], 4
          %s631 = int_to_ptr.vmem [resolvable:$true] %s630
          %633 = dma.hbm_to_vmem [thread:$0]  %s16, 16, %s631, [#allocation27]
        $region76: #{tpu_custom_call.1} parent=11 // pred_fallthru
          _
      $region12: #{tpu_custom_call.1} parent=5 // pred_fallthru
        _
      %p634 = scmp.lt.s32.totalorder %s37, 2
      // Predicated region
      $region77: #{tpu_custom_call.1} parent=5 // pred_check
        %p635 = pneg %p634
      $region78: #{tpu_custom_call.1} parent=5 // pred_check_branch
        %637 = sbr.rel (%p635) target = $region80
      $region79: #{tpu_custom_call.1} parent=5 // pred_region
        // Predicated region
        $region81: #{tpu_custom_call.1} parent=79 // pred_check
          %p638 = pneg %p57
        $region82: #{tpu_custom_call.1} parent=79 // pred_check_branch
          %640 = sbr.rel (%p638) target = $region84
        $region83: #{tpu_custom_call.1} parent=79 // pred_region
          %s641 = sand.u32 %s47, 1
          %s642 = scalar_lea.sflag [#allocation3], %s641
          %s643 = sand.u32 %s47, 1
          %s644 = smul.addr %s643, 8
          %s645 = scalar_lea.vmem [#allocation2], %s644
          %s647 = ssub.s32 128, 128
          %648 = vsyncadd %s642, %s647
          %s649 = smul.addr %s37, 128
          %s650 = scalar_lea.hbm %s0, %s649
          %s652 = sshll.u32 %s645, 4
          %s653 = int_to_ptr.vmem [resolvable:$true] %s652
          %655 = dma.hbm_to_vmem [thread:$0]  %s650, 128, %s653, %s642
        $region84: #{tpu_custom_call.1} parent=79 // pred_fallthru
          _
      $region80: #{tpu_custom_call.1} parent=5 // pred_fallthru
        _
      %p656 = scmp.le.s32.totalorder 1, %s37
      %p657 = scmp.lt.s32.totalorder %s37, 3
      %p658 = pnand %p656, %p657
      %p659 = pneg %p658
      // Predicated region
      $region85: #{tpu_custom_call.1} parent=5 // pred_check
        _
      $region86: #{tpu_custom_call.1} parent=5 // pred_check_branch
        %661 = sbr.rel (%p658) target = $region88
      $region87: #{tpu_custom_call.1} parent=5 // pred_region
        %s662 = ssub.s32 %s37, 1
        %s663 = sand.u32 %s50, 1
        %s664 = scalar_lea.sflag [#allocation3], %s663
        %s665 = sand.u32 %s50, 1
        %s666 = smul.addr %s665, 8
        %s667 = scalar_lea.vmem [#allocation2], %s666
        // Predicated region
        $region89: #{tpu_custom_call.1} parent=87 // pred_check
          %p668 = pneg %p63
        $region90: #{tpu_custom_call.1} parent=87 // pred_check_branch
          %670 = sbr.rel (%p668) target = $region92
        $region91: #{tpu_custom_call.1} parent=87 // pred_region
          %671 = dma.done %s664, 128
        $region92: #{tpu_custom_call.1} parent=87 // pred_fallthru
          _
        // Predicated region
        $region93: #{tpu_custom_call.1} parent=87 // pred_check
          %p672 = pneg %p84
        $region94: #{tpu_custom_call.1} parent=87 // pred_check_branch
          %674 = sbr.rel (%p672) target = $region96
        $region95: #{tpu_custom_call.1} parent=87 // pred_region
          %675 = dma.done [#allocation6], 16
        $region96: #{tpu_custom_call.1} parent=87 // pred_fallthru
          _
        // Predicated region
        $region97: #{tpu_custom_call.1} parent=87 // pred_check
          %p676 = pneg %p105
        $region98: #{tpu_custom_call.1} parent=87 // pred_check_branch
          %678 = sbr.rel (%p676) target = $region100
        $region99: #{tpu_custom_call.1} parent=87 // pred_region
          %679 = dma.done [#allocation6], 16
        $region100: #{tpu_custom_call.1} parent=87 // pred_fallthru
          _
        // Predicated region
        $region101: #{tpu_custom_call.1} parent=87 // pred_check
          %p680 = pneg %p126
        $region102: #{tpu_custom_call.1} parent=87 // pred_check_branch
          %682 = sbr.rel (%p680) target = $region104
        $region103: #{tpu_custom_call.1} parent=87 // pred_region
          %683 = dma.done [#allocation9], 1024
        $region104: #{tpu_custom_call.1} parent=87 // pred_fallthru
          _
        // Predicated region
        $region105: #{tpu_custom_call.1} parent=87 // pred_check
          %p684 = pneg %p147
        $region106: #{tpu_custom_call.1} parent=87 // pred_check_branch
          %686 = sbr.rel (%p684) target = $region108
        $region107: #{tpu_custom_call.1} parent=87 // pred_region
          %687 = dma.done [#allocation9], 1024
        $region108: #{tpu_custom_call.1} parent=87 // pred_fallthru
          _
        // Predicated region
        $region109: #{tpu_custom_call.1} parent=87 // pred_check
          %p688 = pneg %p168
        $region110: #{tpu_custom_call.1} parent=87 // pred_check_branch
          %690 = sbr.rel (%p688) target = $region112
        $region111: #{tpu_custom_call.1} parent=87 // pred_region
          %691 = dma.done [#allocation12], 1024
        $region112: #{tpu_custom_call.1} parent=87 // pred_fallthru
          _
        // Predicated region
        $region113: #{tpu_custom_call.1} parent=87 // pred_check
          %p692 = pneg %p189
        $region114: #{tpu_custom_call.1} parent=87 // pred_check_branch
          %694 = sbr.rel (%p692) target = $region116
        $region115: #{tpu_custom_call.1} parent=87 // pred_region
          %695 = dma.done [#allocation12], 64
        $region116: #{tpu_custom_call.1} parent=87 // pred_fallthru
          _
        // Predicated region
        $region117: #{tpu_custom_call.1} parent=87 // pred_check
          %p696 = pneg %p210
        $region118: #{tpu_custom_call.1} parent=87 // pred_check_branch
          %698 = sbr.rel (%p696) target = $region120
        $region119: #{tpu_custom_call.1} parent=87 // pred_region
          %699 = dma.done [#allocation15], 64
        $region120: #{tpu_custom_call.1} parent=87 // pred_fallthru
          _
        // Predicated region
        $region121: #{tpu_custom_call.1} parent=87 // pred_check
          %p700 = pneg %p231
        $region122: #{tpu_custom_call.1} parent=87 // pred_check_branch
          %702 = sbr.rel (%p700) target = $region124
        $region123: #{tpu_custom_call.1} parent=87 // pred_region
          %703 = dma.done [#allocation15], 64
        $region124: #{tpu_custom_call.1} parent=87 // pred_fallthru
          _
        // Predicated region
        $region125: #{tpu_custom_call.1} parent=87 // pred_check
          %p704 = pneg %p252
        $region126: #{tpu_custom_call.1} parent=87 // pred_check_branch
          %706 = sbr.rel (%p704) target = $region128
        $region127: #{tpu_custom_call.1} parent=87 // pred_region
          %707 = dma.done [#allocation18], 256
        $region128: #{tpu_custom_call.1} parent=87 // pred_fallthru
          _
        // Predicated region
        $region129: #{tpu_custom_call.1} parent=87 // pred_check
          %p708 = pneg %p273
        $region130: #{tpu_custom_call.1} parent=87 // pred_check_branch
          %710 = sbr.rel (%p708) target = $region132
        $region131: #{tpu_custom_call.1} parent=87 // pred_region
          %711 = dma.done [#allocation18], 16
        $region132: #{tpu_custom_call.1} parent=87 // pred_fallthru
          _
        // Predicated region
        $region133: #{tpu_custom_call.1} parent=87 // pred_check
          %p712 = pneg %p294
        $region134: #{tpu_custom_call.1} parent=87 // pred_check_branch
          %714 = sbr.rel (%p712) target = $region136
        $region135: #{tpu_custom_call.1} parent=87 // pred_region
          %715 = dma.done [#allocation21], 16
        $region136: #{tpu_custom_call.1} parent=87 // pred_fallthru
          _
        // Predicated region
        $region137: #{tpu_custom_call.1} parent=87 // pred_check
          %p716 = pneg %p315
        $region138: #{tpu_custom_call.1} parent=87 // pred_check_branch
          %718 = sbr.rel (%p716) target = $region140
        $region139: #{tpu_custom_call.1} parent=87 // pred_region
          %719 = dma.done [#allocation21], 16
        $region140: #{tpu_custom_call.1} parent=87 // pred_fallthru
          _
        // Predicated region
        $region141: #{tpu_custom_call.1} parent=87 // pred_check
          %p720 = pneg %p336
        $region142: #{tpu_custom_call.1} parent=87 // pred_check_branch
          %722 = sbr.rel (%p720) target = $region144
        $region143: #{tpu_custom_call.1} parent=87 // pred_region
          %723 = dma.done [#allocation24], 256
        $region144: #{tpu_custom_call.1} parent=87 // pred_fallthru
          _
        // Predicated region
        $region145: #{tpu_custom_call.1} parent=87 // pred_check
          %p724 = pneg %p357
        $region146: #{tpu_custom_call.1} parent=87 // pred_check_branch
          %726 = sbr.rel (%p724) target = $region148
        $region147: #{tpu_custom_call.1} parent=87 // pred_region
          %727 = dma.done [#allocation24], 16
        $region148: #{tpu_custom_call.1} parent=87 // pred_fallthru
          _
        // Predicated region
        $region149: #{tpu_custom_call.1} parent=87 // pred_check
          %p728 = pneg %p378
        $region150: #{tpu_custom_call.1} parent=87 // pred_check_branch
          %730 = sbr.rel (%p728) target = $region152
        $region151: #{tpu_custom_call.1} parent=87 // pred_region
          %731 = dma.done [#allocation27], 1024
        $region152: #{tpu_custom_call.1} parent=87 // pred_fallthru
          _
        // Predicated region
        $region153: #{tpu_custom_call.1} parent=87 // pred_check
          %p732 = pneg %p399
        $region154: #{tpu_custom_call.1} parent=87 // pred_check_branch
          %734 = sbr.rel (%p732) target = $region156
        $region155: #{tpu_custom_call.1} parent=87 // pred_region
          %735 = dma.done [#allocation27], 16
        $region156: #{tpu_custom_call.1} parent=87 // pred_fallthru
          _
        %s736 = sand.u32 %s50, 1
        %s737 = scalar_lea.sflag [#allocation3], %s736
        %s738 = sand.u32 %s50, 1
        %s739 = smul.addr %s738, 8
        %s740 = scalar_lea.vmem [#allocation2], %s739
        %p741 = pneg %p63
        %p742 = pneg %p60
        %p743 = pneg %p84
        %p744 = pneg %p81
        %p745 = pneg %p105
        %p746 = pneg %p102
        %p747 = pneg %p126
        %p748 = pneg %p123
        %p749 = pneg %p147
        %p750 = pneg %p144
        %p751 = pneg %p168
        %p752 = pneg %p165
        %p753 = pneg %p189
        %p754 = pneg %p186
        %p755 = pneg %p210
        %p756 = pneg %p207
        %p757 = pneg %p231
        %p758 = pneg %p228
        %p759 = pneg %p252
        %p760 = pneg %p249
        %p761 = pneg %p273
        %p762 = pneg %p270
        %p763 = pneg %p294
        %p764 = pneg %p291
        %p765 = pneg %p315
        %p766 = pneg %p312
        %p767 = pneg %p336
        %p768 = pneg %p333
        %p769 = pneg %p357
        %p770 = pneg %p354
        %p771 = pneg %p378
        %p772 = pneg %p375
        %p773 = pneg %p399
        %p774 = pneg %p396
        %p775 = pneg %p425
        %p776 = pneg %p422
        %s777 = sand.u32 %s412, 1
        %s778 = scalar_lea.sflag [#allocation4], %s777
        %s779 = sand.u32 %s412, 1
        %s780 = smul.addr %s779, 8
        %s781 = scalar_lea.vmem [#allocation29], %s780
        %v783 = vld [vmem:[%s667] sm:$0xff]
        %v784 = vld [vmem:[#allocation5] sm:$0x1]
        %v785 = vld [vmem:[#allocation7] sm:$0x1]
        %vm786 = vcmask 261120
        %v787 = vsel %vm786, %v783, 0.0
        %788 = vadd.xlane.f32.xlu0 %v787
        %v789 = vpop.xlane.xlu0 %788
        %v790 = vrcp.pop 32.0
        %v791 = vmul.f32 %v789, %v790
        %v792 = vsub.f32 %v783, %v791
        %v793 = vmul.f32 %v792, %v792
        %v794 = vsel %vm786, %v793, 0.0
        %795 = vadd.xlane.f32.xlu0 %v794
        %v796 = vpop.xlane.xlu0 %795
        %v797 = vmul.f32 %v796, %v790
        %v798 = vadd.f32 %v797, 1e-05
        %v799 = vrsqrt.pop %v798
        %v800 = vmul.f32 %v792, %v799
        %v802 = vlaneseq
        %v803 = vshrl.u32 %v802, 7
        %v804 = vsub.s32 0, %v803
        %v805 = vrot.slane %v784, %v804
        %v807 = vmul.f32 %v800, %v805
        %v809 = vlaneseq
        %v810 = vshrl.u32 %v809, 7
        %v811 = vsub.s32 0, %v810
        %v812 = vrot.slane %v785, %v811
        %v814 = vadd.f32 %v807, %v812
        %v815 = vpack.c.bf16 %v814, %v814
        %v816 = vld [vmem:[#allocation8] sm:$0xf]
        %v817 = vld [vmem:[#allocation8 + $0x4] sm:$0xf]
        %v818 = vld [vmem:[#allocation8 + $0x8] sm:$0xf]
        %v819 = vld [vmem:[#allocation8 + $0xc] sm:$0xf]
        %v820 = vld [vmem:[#allocation8 + $0x10] sm:$0xf]
        %v821 = vld [vmem:[#allocation8 + $0x14] sm:$0xf]
        %v822 = vld [vmem:[#allocation8 + $0x18] sm:$0xf]
        %v823 = vld [vmem:[#allocation8 + $0x1c] sm:$0xf]
        %v824 = vld [vmem:[#allocation8 + $0x20] sm:$0xf]
        %v825 = vld [vmem:[#allocation8 + $0x24] sm:$0xf]
        %v826 = vld [vmem:[#allocation8 + $0x28] sm:$0xf]
        %v827 = vld [vmem:[#allocation8 + $0x2c] sm:$0xf]
        %v828 = vld [vmem:[#allocation8 + $0x30] sm:$0xf]
        %v829 = vld [vmem:[#allocation8 + $0x34] sm:$0xf]
        %v830 = vld [vmem:[#allocation8 + $0x38] sm:$0xf]
        %v831 = vld [vmem:[#allocation8 + $0x3c] sm:$0xf]
        %v832 = vld [vmem:[#allocation13] sm:$0x1]
        %v833 = vld [vmem:[#allocation13 + $0x1] sm:$0x1]
        %v834 = vld [vmem:[#allocation13 + $0x2] sm:$0x1]
        %v835 = vld [vmem:[#allocation13 + $0x3] sm:$0x1]
        %v840 = vlaneseq
        %v841 = vshrl.u32 %v840, 7
        %v842 = vsub.s32 0, %v841
        %v843 = vrot.slane %v832, %v842
        %v844 = vlaneseq
        %v845 = vshrl.u32 %v844, 7
        %v846 = vsub.s32 0, %v845
        %v847 = vrot.slane %v833, %v846
        %v848 = vlaneseq
        %v849 = vshrl.u32 %v848, 7
        %v850 = vsub.s32 0, %v849
        %v851 = vrot.slane %v834, %v850
        %v852 = vlaneseq
        %v853 = vshrl.u32 %v852, 7
        %v854 = vsub.s32 0, %v853
        %v855 = vrot.slane %v835, %v854
        %v864 = vunpack.c.l.b16 %v816
        %v865 = vunpack.c.l.b16 %v817
        %v866 = vunpack.c.l.b16 %v818
        %v867 = vunpack.c.l.b16 %v819
        %v868 = vpack.c.b16 %v865, %v864
        %v869 = vpack.c.b16 %v867, %v866
        %v873 = vsel %vm786, %v815, 0
        %875 = vmatprep.subr.bf16.mxu0 0
        %876 = vmatpush1.bf16.msra.mxu0 %v868
        %877 = vmatprep.subr.bf16.mxu0 0
        %878 = vmatpush1.bf16.msra.mxu0 %v869
        %879 = vmatprep.subr.bf16.mxu0 0
        %880 = vmatpush1.bf16.msra.mxu0 0
        %881 = vmatprep.subr.bf16.mxu0 0
        %882 = vmatpush1.bf16.msra.mxu0 0
        %883 = vmatprep.subr.bf16.mxu0 0
        %884 = vmatpush1.bf16.msra.mxu0 0
        %885 = vmatprep.subr.bf16.mxu0 0
        %886 = vmatpush1.bf16.msra.mxu0 0
        %887 = vmatprep.subr.bf16.mxu0 0
        %888 = vmatpush1.bf16.msra.mxu0 0
        %889 = vmatprep.subr.bf16.mxu0 0
        %890 = vmatpush1.bf16.msra.mxu0 0
        %891 = vmatprep.subr.bf16.mxu0 0
        %892 = vmatpush1.bf16.msra.mxu0 0
        %893 = vmatprep.subr.bf16.mxu0 0
        %894 = vmatpush1.bf16.msra.mxu0 0
        %895 = vmatprep.subr.bf16.mxu0 0
        %896 = vmatpush1.bf16.msra.mxu0 0
        %897 = vmatprep.subr.bf16.mxu0 0
        %898 = vmatpush1.bf16.msra.mxu0 0
        %899 = vmatprep.subr.bf16.mxu0 0
        %900 = vmatpush1.bf16.msra.mxu0 0
        %901 = vmatprep.subr.bf16.mxu0 0
        %902 = vmatpush1.bf16.msra.mxu0 0
        %903 = vmatprep.subr.bf16.mxu0 0
        %904 = vmatpush1.bf16.msra.mxu0 0
        %905 = vmatprep.subr.bf16.mxu0 0
        %906 = vmatpush1.bf16.msra.mxu0 0
        %907 = vmatprep.mubr.bf16.mxu0 0
        %908 = vmatmul.mubr.bf16.gmra.mrb[0].mxu0 %v873
        %v909 = vpop.f32.mrb[0].mxu0
        %v910 = vadd.f32 %v843, %v909
        %v911 = vpop.f32.mrb[0].mxu0
        %v912 = vpop.f32.mrb[0].mxu0
        %v913 = vpop.f32.mrb[0].mxu0
        %914 = vdwg.mxu0
        %v919 = vunpack.c.l.b16 %v820
        %v920 = vunpack.c.l.b16 %v821
        %v921 = vunpack.c.l.b16 %v822
        %v922 = vunpack.c.l.b16 %v823
        %v923 = vpack.c.b16 %v920, %v919
        %v924 = vpack.c.b16 %v922, %v921
        %927 = vmatprep.subr.bf16.mxu0 0
        %928 = vmatpush1.bf16.msra.mxu0 %v923
        %929 = vmatprep.subr.bf16.mxu0 0
        %930 = vmatpush1.bf16.msra.mxu0 %v924
        %931 = vmatprep.subr.bf16.mxu0 0
        %932 = vmatpush1.bf16.msra.mxu0 0
        %933 = vmatprep.subr.bf16.mxu0 0
        %934 = vmatpush1.bf16.msra.mxu0 0
        %935 = vmatprep.subr.bf16.mxu0 0
        %936 = vmatpush1.bf16.msra.mxu0 0
        %937 = vmatprep.subr.bf16.mxu0 0
        %938 = vmatpush1.bf16.msra.mxu0 0
        %939 = vmatprep.subr.bf16.mxu0 0
        %940 = vmatpush1.bf16.msra.mxu0 0
        %941 = vmatprep.subr.bf16.mxu0 0
        %942 = vmatpush1.bf16.msra.mxu0 0
        %943 = vmatprep.subr.bf16.mxu0 0
        %944 = vmatpush1.bf16.msra.mxu0 0
        %945 = vmatprep.subr.bf16.mxu0 0
        %946 = vmatpush1.bf16.msra.mxu0 0
        %947 = vmatprep.subr.bf16.mxu0 0
        %948 = vmatpush1.bf16.msra.mxu0 0
        %949 = vmatprep.subr.bf16.mxu0 0
        %950 = vmatpush1.bf16.msra.mxu0 0
        %951 = vmatprep.subr.bf16.mxu0 0
        %952 = vmatpush1.bf16.msra.mxu0 0
        %953 = vmatprep.subr.bf16.mxu0 0
        %954 = vmatpush1.bf16.msra.mxu0 0
        %955 = vmatprep.subr.bf16.mxu0 0
        %956 = vmatpush1.bf16.msra.mxu0 0
        %957 = vmatprep.subr.bf16.mxu0 0
        %958 = vmatpush1.bf16.msra.mxu0 0
        %959 = vmatprep.mubr.bf16.mxu0 0
        %960 = vmatmul.mubr.bf16.gmra.mrb[0].mxu0 %v873
        %v961 = vpop.f32.mrb[0].mxu0
        %v962 = vadd.f32 %v847, %v961
        %v963 = vpop.f32.mrb[0].mxu0
        %v964 = vpop.f32.mrb[0].mxu0
        %v965 = vpop.f32.mrb[0].mxu0
        %966 = vdwg.mxu0
        %v971 = vunpack.c.l.b16 %v824
        %v972 = vunpack.c.l.b16 %v825
        %v973 = vunpack.c.l.b16 %v826
        %v974 = vunpack.c.l.b16 %v827
        %v975 = vpack.c.b16 %v972, %v971
        %v976 = vpack.c.b16 %v974, %v973
        %979 = vmatprep.subr.bf16.mxu0 0
        %980 = vmatpush1.bf16.msra.mxu0 %v975
        %981 = vmatprep.subr.bf16.mxu0 0
        %982 = vmatpush1.bf16.msra.mxu0 %v976
        %983 = vmatprep.subr.bf16.mxu0 0
        %984 = vmatpush1.bf16.msra.mxu0 0
        %985 = vmatprep.subr.bf16.mxu0 0
        %986 = vmatpush1.bf16.msra.mxu0 0
        %987 = vmatprep.subr.bf16.mxu0 0
        %988 = vmatpush1.bf16.msra.mxu0 0
        %989 = vmatprep.subr.bf16.mxu0 0
        %990 = vmatpush1.bf16.msra.mxu0 0
        %991 = vmatprep.subr.bf16.mxu0 0
        %992 = vmatpush1.bf16.msra.mxu0 0
        %993 = vmatprep.subr.bf16.mxu0 0
        %994 = vmatpush1.bf16.msra.mxu0 0
        %995 = vmatprep.subr.bf16.mxu0 0
        %996 = vmatpush1.bf16.msra.mxu0 0
        %997 = vmatprep.subr.bf16.mxu0 0
        %998 = vmatpush1.bf16.msra.mxu0 0
        %999 = vmatprep.subr.bf16.mxu0 0
        %1000 = vmatpush1.bf16.msra.mxu0 0
        %1001 = vmatprep.subr.bf16.mxu0 0
        %1002 = vmatpush1.bf16.msra.mxu0 0
        %1003 = vmatprep.subr.bf16.mxu0 0
        %1004 = vmatpush1.bf16.msra.mxu0 0
        %1005 = vmatprep.subr.bf16.mxu0 0
        %1006 = vmatpush1.bf16.msra.mxu0 0
        %1007 = vmatprep.subr.bf16.mxu0 0
        %1008 = vmatpush1.bf16.msra.mxu0 0
        %1009 = vmatprep.subr.bf16.mxu0 0
        %1010 = vmatpush1.bf16.msra.mxu0 0
        %1011 = vmatprep.mubr.bf16.mxu0 0
        %1012 = vmatmul.mubr.bf16.gmra.mrb[0].mxu0 %v873
        %v1013 = vpop.f32.mrb[0].mxu0
        %v1014 = vadd.f32 %v851, %v1013
        %v1015 = vpop.f32.mrb[0].mxu0
        %v1016 = vpop.f32.mrb[0].mxu0
        %v1017 = vpop.f32.mrb[0].mxu0
        %1018 = vdwg.mxu0
        %v1023 = vunpack.c.l.b16 %v828
        %v1024 = vunpack.c.l.b16 %v829
        %v1025 = vunpack.c.l.b16 %v830
        %v1026 = vunpack.c.l.b16 %v831
        %v1027 = vpack.c.b16 %v1024, %v1023
        %v1028 = vpack.c.b16 %v1026, %v1025
        %1031 = vmatprep.subr.bf16.mxu0 0
        %1032 = vmatpush1.bf16.msra.mxu0 %v1027
        %1033 = vmatprep.subr.bf16.mxu0 0
        %1034 = vmatpush1.bf16.msra.mxu0 %v1028
        %1035 = vmatprep.subr.bf16.mxu0 0
        %1036 = vmatpush1.bf16.msra.mxu0 0
        %1037 = vmatprep.subr.bf16.mxu0 0
        %1038 = vmatpush1.bf16.msra.mxu0 0
        %1039 = vmatprep.subr.bf16.mxu0 0
        %1040 = vmatpush1.bf16.msra.mxu0 0
        %1041 = vmatprep.subr.bf16.mxu0 0
        %1042 = vmatpush1.bf16.msra.mxu0 0
        %1043 = vmatprep.subr.bf16.mxu0 0
        %1044 = vmatpush1.bf16.msra.mxu0 0
        %1045 = vmatprep.subr.bf16.mxu0 0
        %1046 = vmatpush1.bf16.msra.mxu0 0
        %1047 = vmatprep.subr.bf16.mxu0 0
        %1048 = vmatpush1.bf16.msra.mxu0 0
        %1049 = vmatprep.subr.bf16.mxu0 0
        %1050 = vmatpush1.bf16.msra.mxu0 0
        %1051 = vmatprep.subr.bf16.mxu0 0
        %1052 = vmatpush1.bf16.msra.mxu0 0
        %1053 = vmatprep.subr.bf16.mxu0 0
        %1054 = vmatpush1.bf16.msra.mxu0 0
        %1055 = vmatprep.subr.bf16.mxu0 0
        %1056 = vmatpush1.bf16.msra.mxu0 0
        %1057 = vmatprep.subr.bf16.mxu0 0
        %1058 = vmatpush1.bf16.msra.mxu0 0
        %1059 = vmatprep.subr.bf16.mxu0 0
        %1060 = vmatpush1.bf16.msra.mxu0 0
        %1061 = vmatprep.subr.bf16.mxu0 0
        %1062 = vmatpush1.bf16.msra.mxu0 0
        %1063 = vmatprep.mubr.bf16.mxu0 0
        %1064 = vmatmul.mubr.bf16.gmra.mrb[0].mxu0 %v873
        %v1065 = vpop.f32.mrb[0].mxu0
        %v1066 = vadd.f32 %v855, %v1065
        %v1067 = vpop.f32.mrb[0].mxu0
        %v1068 = vpop.f32.mrb[0].mxu0
        %v1069 = vpop.f32.mrb[0].mxu0
        %1070 = vdwg.mxu0
        %v1071 = vld [vmem:[#allocation10] sm:$0xf]
        %v1072 = vld [vmem:[#allocation10 + $0x4] sm:$0xf]
        %v1073 = vld [vmem:[#allocation10 + $0x8] sm:$0xf]
        %v1074 = vld [vmem:[#allocation10 + $0xc] sm:$0xf]
        %v1075 = vld [vmem:[#allocation10 + $0x10] sm:$0xf]
        %v1076 = vld [vmem:[#allocation10 + $0x14] sm:$0xf]
        %v1077 = vld [vmem:[#allocation10 + $0x18] sm:$0xf]
        %v1078 = vld [vmem:[#allocation10 + $0x1c] sm:$0xf]
        %v1079 = vld [vmem:[#allocation10 + $0x20] sm:$0xf]
        %v1080 = vld [vmem:[#allocation10 + $0x24] sm:$0xf]
        %v1081 = vld [vmem:[#allocation10 + $0x28] sm:$0xf]
        %v1082 = vld [vmem:[#allocation10 + $0x2c] sm:$0xf]
        %v1083 = vld [vmem:[#allocation10 + $0x30] sm:$0xf]
        %v1084 = vld [vmem:[#allocation10 + $0x34] sm:$0xf]
        %v1085 = vld [vmem:[#allocation10 + $0x38] sm:$0xf]
        %v1086 = vld [vmem:[#allocation10 + $0x3c] sm:$0xf]
        %v1087 = vld [vmem:[#allocation14] sm:$0x1]
        %v1088 = vld [vmem:[#allocation14 + $0x1] sm:$0x1]
        %v1089 = vld [vmem:[#allocation14 + $0x2] sm:$0x1]
        %v1090 = vld [vmem:[#allocation14 + $0x3] sm:$0x1]
        %v1095 = vlaneseq
        %v1096 = vshrl.u32 %v1095, 7
        %v1097 = vsub.s32 0, %v1096
        %v1098 = vrot.slane %v1087, %v1097
        %v1099 = vlaneseq
        %v1100 = vshrl.u32 %v1099, 7
        %v1101 = vsub.s32 0, %v1100
        %v1102 = vrot.slane %v1088, %v1101
        %v1103 = vlaneseq
        %v1104 = vshrl.u32 %v1103, 7
        %v1105 = vsub.s32 0, %v1104
        %v1106 = vrot.slane %v1089, %v1105
        %v1107 = vlaneseq
        %v1108 = vshrl.u32 %v1107, 7
        %v1109 = vsub.s32 0, %v1108
        %v1110 = vrot.slane %v1090, %v1109
        %v1119 = vunpack.c.l.b16 %v1071
        %v1120 = vunpack.c.l.b16 %v1072
        %v1121 = vunpack.c.l.b16 %v1073
        %v1122 = vunpack.c.l.b16 %v1074
        %v1123 = vpack.c.b16 %v1120, %v1119
        %v1124 = vpack.c.b16 %v1122, %v1121
        %1127 = vmatprep.subr.bf16.mxu0 0
        %1128 = vmatpush1.bf16.msra.mxu0 %v1123
        %1129 = vmatprep.subr.bf16.mxu0 0
        %1130 = vmatpush1.bf16.msra.mxu0 %v1124
        %1131 = vmatprep.subr.bf16.mxu0 0
        %1132 = vmatpush1.bf16.msra.mxu0 0
        %1133 = vmatprep.subr.bf16.mxu0 0
        %1134 = vmatpush1.bf16.msra.mxu0 0
        %1135 = vmatprep.subr.bf16.mxu0 0
        %1136 = vmatpush1.bf16.msra.mxu0 0
        %1137 = vmatprep.subr.bf16.mxu0 0
        %1138 = vmatpush1.bf16.msra.mxu0 0
        %1139 = vmatprep.subr.bf16.mxu0 0
        %1140 = vmatpush1.bf16.msra.mxu0 0
        %1141 = vmatprep.subr.bf16.mxu0 0
        %1142 = vmatpush1.bf16.msra.mxu0 0
        %1143 = vmatprep.subr.bf16.mxu0 0
        %1144 = vmatpush1.bf16.msra.mxu0 0
        %1145 = vmatprep.subr.bf16.mxu0 0
        %1146 = vmatpush1.bf16.msra.mxu0 0
        %1147 = vmatprep.subr.bf16.mxu0 0
        %1148 = vmatpush1.bf16.msra.mxu0 0
        %1149 = vmatprep.subr.bf16.mxu0 0
        %1150 = vmatpush1.bf16.msra.mxu0 0
        %1151 = vmatprep.subr.bf16.mxu0 0
        %1152 = vmatpush1.bf16.msra.mxu0 0
        %1153 = vmatprep.subr.bf16.mxu0 0
        %1154 = vmatpush1.bf16.msra.mxu0 0
        %1155 = vmatprep.subr.bf16.mxu0 0
        %1156 = vmatpush1.bf16.msra.mxu0 0
        %1157 = vmatprep.subr.bf16.mxu0 0
        %1158 = vmatpush1.bf16.msra.mxu0 0
        %1159 = vmatprep.mubr.bf16.mxu0 0
        %1160 = vmatmul.mubr.bf16.gmra.mrb[0].mxu0 %v873
        %v1161 = vpop.f32.mrb[0].mxu0
        %v1162 = vadd.f32 %v1098, %v1161
        %v1163 = vpop.f32.mrb[0].mxu0
        %v1164 = vpop.f32.mrb[0].mxu0
        %v1165 = vpop.f32.mrb[0].mxu0
        %1166 = vdwg.mxu0
        %v1171 = vunpack.c.l.b16 %v1075
        %v1172 = vunpack.c.l.b16 %v1076
        %v1173 = vunpack.c.l.b16 %v1077
        %v1174 = vunpack.c.l.b16 %v1078
        %v1175 = vpack.c.b16 %v1172, %v1171
        %v1176 = vpack.c.b16 %v1174, %v1173
        %1179 = vmatprep.subr.bf16.mxu0 0
        %1180 = vmatpush1.bf16.msra.mxu0 %v1175
        %1181 = vmatprep.subr.bf16.mxu0 0
        %1182 = vmatpush1.bf16.msra.mxu0 %v1176
        %1183 = vmatprep.subr.bf16.mxu0 0
        %1184 = vmatpush1.bf16.msra.mxu0 0
        %1185 = vmatprep.subr.bf16.mxu0 0
        %1186 = vmatpush1.bf16.msra.mxu0 0
        %1187 = vmatprep.subr.bf16.mxu0 0
        %1188 = vmatpush1.bf16.msra.mxu0 0
        %1189 = vmatprep.subr.bf16.mxu0 0
        %1190 = vmatpush1.bf16.msra.mxu0 0
        %1191 = vmatprep.subr.bf16.mxu0 0
        %1192 = vmatpush1.bf16.msra.mxu0 0
        %1193 = vmatprep.subr.bf16.mxu0 0
        %1194 = vmatpush1.bf16.msra.mxu0 0
        %1195 = vmatprep.subr.bf16.mxu0 0
        %1196 = vmatpush1.bf16.msra.mxu0 0
        %1197 = vmatprep.subr.bf16.mxu0 0
        %1198 = vmatpush1.bf16.msra.mxu0 0
        %1199 = vmatprep.subr.bf16.mxu0 0
        %1200 = vmatpush1.bf16.msra.mxu0 0
        %1201 = vmatprep.subr.bf16.mxu0 0
        %1202 = vmatpush1.bf16.msra.mxu0 0
        %1203 = vmatprep.subr.bf16.mxu0 0
        %1204 = vmatpush1.bf16.msra.mxu0 0
        %1205 = vmatprep.subr.bf16.mxu0 0
        %1206 = vmatpush1.bf16.msra.mxu0 0
        %1207 = vmatprep.subr.bf16.mxu0 0
        %1208 = vmatpush1.bf16.msra.mxu0 0
        %1209 = vmatprep.subr.bf16.mxu0 0
        %1210 = vmatpush1.bf16.msra.mxu0 0
        %1211 = vmatprep.mubr.bf16.mxu0 0
        %1212 = vmatmul.mubr.bf16.gmra.mrb[0].mxu0 %v873
        %v1213 = vpop.f32.mrb[0].mxu0
        %v1214 = vadd.f32 %v1102, %v1213
        %v1215 = vpop.f32.mrb[0].mxu0
        %v1216 = vpop.f32.mrb[0].mxu0
        %v1217 = vpop.f32.mrb[0].mxu0
        %1218 = vdwg.mxu0
        %v1223 = vunpack.c.l.b16 %v1079
        %v1224 = vunpack.c.l.b16 %v1080
        %v1225 = vunpack.c.l.b16 %v1081
        %v1226 = vunpack.c.l.b16 %v1082
        %v1227 = vpack.c.b16 %v1224, %v1223
        %v1228 = vpack.c.b16 %v1226, %v1225
        %1231 = vmatprep.subr.bf16.mxu0 0
        %1232 = vmatpush1.bf16.msra.mxu0 %v1227
        %1233 = vmatprep.subr.bf16.mxu0 0
        %1234 = vmatpush1.bf16.msra.mxu0 %v1228
        %1235 = vmatprep.subr.bf16.mxu0 0
        %1236 = vmatpush1.bf16.msra.mxu0 0
        %1237 = vmatprep.subr.bf16.mxu0 0
        %1238 = vmatpush1.bf16.msra.mxu0 0
        %1239 = vmatprep.subr.bf16.mxu0 0
        %1240 = vmatpush1.bf16.msra.mxu0 0
        %1241 = vmatprep.subr.bf16.mxu0 0
        %1242 = vmatpush1.bf16.msra.mxu0 0
        %1243 = vmatprep.subr.bf16.mxu0 0
        %1244 = vmatpush1.bf16.msra.mxu0 0
        %1245 = vmatprep.subr.bf16.mxu0 0
        %1246 = vmatpush1.bf16.msra.mxu0 0
        %1247 = vmatprep.subr.bf16.mxu0 0
        %1248 = vmatpush1.bf16.msra.mxu0 0
        %1249 = vmatprep.subr.bf16.mxu0 0
        %1250 = vmatpush1.bf16.msra.mxu0 0
        %1251 = vmatprep.subr.bf16.mxu0 0
        %1252 = vmatpush1.bf16.msra.mxu0 0
        %1253 = vmatprep.subr.bf16.mxu0 0
        %1254 = vmatpush1.bf16.msra.mxu0 0
        %1255 = vmatprep.subr.bf16.mxu0 0
        %1256 = vmatpush1.bf16.msra.mxu0 0
        %1257 = vmatprep.subr.bf16.mxu0 0
        %1258 = vmatpush1.bf16.msra.mxu0 0
        %1259 = vmatprep.subr.bf16.mxu0 0
        %1260 = vmatpush1.bf16.msra.mxu0 0
        %1261 = vmatprep.subr.bf16.mxu0 0
        %1262 = vmatpush1.bf16.msra.mxu0 0
        %1263 = vmatprep.mubr.bf16.mxu0 0
        %1264 = vmatmul.mubr.bf16.gmra.mrb[0].mxu0 %v873
        %v1265 = vpop.f32.mrb[0].mxu0
        %v1266 = vadd.f32 %v1106, %v1265
        %v1267 = vpop.f32.mrb[0].mxu0
        %v1268 = vpop.f32.mrb[0].mxu0
        %v1269 = vpop.f32.mrb[0].mxu0
        %1270 = vdwg.mxu0
        %v1275 = vunpack.c.l.b16 %v1083
        %v1276 = vunpack.c.l.b16 %v1084
        %v1277 = vunpack.c.l.b16 %v1085
        %v1278 = vunpack.c.l.b16 %v1086
        %v1279 = vpack.c.b16 %v1276, %v1275
        %v1280 = vpack.c.b16 %v1278, %v1277
        %1283 = vmatprep.subr.bf16.mxu0 0
        %1284 = vmatpush1.bf16.msra.mxu0 %v1279
        %1285 = vmatprep.subr.bf16.mxu0 0
        %1286 = vmatpush1.bf16.msra.mxu0 %v1280
        %1287 = vmatprep.subr.bf16.mxu0 0
        %1288 = vmatpush1.bf16.msra.mxu0 0
        %1289 = vmatprep.subr.bf16.mxu0 0
        %1290 = vmatpush1.bf16.msra.mxu0 0
        %1291 = vmatprep.subr.bf16.mxu0 0
        %1292 = vmatpush1.bf16.msra.mxu0 0
        %1293 = vmatprep.subr.bf16.mxu0 0
        %1294 = vmatpush1.bf16.msra.mxu0 0
        %1295 = vmatprep.subr.bf16.mxu0 0
        %1296 = vmatpush1.bf16.msra.mxu0 0
        %1297 = vmatprep.subr.bf16.mxu0 0
        %1298 = vmatpush1.bf16.msra.mxu0 0
        %1299 = vmatprep.subr.bf16.mxu0 0
        %1300 = vmatpush1.bf16.msra.mxu0 0
        %1301 = vmatprep.subr.bf16.mxu0 0
        %1302 = vmatpush1.bf16.msra.mxu0 0
        %1303 = vmatprep.subr.bf16.mxu0 0
        %1304 = vmatpush1.bf16.msra.mxu0 0
        %1305 = vmatprep.subr.bf16.mxu0 0
        %1306 = vmatpush1.bf16.msra.mxu0 0
        %1307 = vmatprep.subr.bf16.mxu0 0
        %1308 = vmatpush1.bf16.msra.mxu0 0
        %1309 = vmatprep.subr.bf16.mxu0 0
        %1310 = vmatpush1.bf16.msra.mxu0 0
        %1311 = vmatprep.subr.bf16.mxu0 0
        %1312 = vmatpush1.bf16.msra.mxu0 0
        %1313 = vmatprep.subr.bf16.mxu0 0
        %1314 = vmatpush1.bf16.msra.mxu0 0
        %1315 = vmatprep.mubr.bf16.mxu0 0
        %1316 = vmatmul.mubr.bf16.gmra.mrb[0].mxu0 %v873
        %v1317 = vpop.f32.mrb[0].mxu0
        %v1318 = vadd.f32 %v1110, %v1317
        %v1319 = vpop.f32.mrb[0].mxu0
        %v1320 = vpop.f32.mrb[0].mxu0
        %v1321 = vpop.f32.mrb[0].mxu0
        %1322 = vdwg.mxu0
        %v1323 = vld [vmem:[#allocation11] sm:$0xf]
        %v1324 = vld [vmem:[#allocation11 + $0x4] sm:$0xf]
        %v1325 = vld [vmem:[#allocation11 + $0x8] sm:$0xf]
        %v1326 = vld [vmem:[#allocation11 + $0xc] sm:$0xf]
        %v1327 = vld [vmem:[#allocation11 + $0x10] sm:$0xf]
        %v1328 = vld [vmem:[#allocation11 + $0x14] sm:$0xf]
        %v1329 = vld [vmem:[#allocation11 + $0x18] sm:$0xf]
        %v1330 = vld [vmem:[#allocation11 + $0x1c] sm:$0xf]
        %v1331 = vld [vmem:[#allocation11 + $0x20] sm:$0xf]
        %v1332 = vld [vmem:[#allocation11 + $0x24] sm:$0xf]
        %v1333 = vld [vmem:[#allocation11 + $0x28] sm:$0xf]
        %v1334 = vld [vmem:[#allocation11 + $0x2c] sm:$0xf]
        %v1335 = vld [vmem:[#allocation11 + $0x30] sm:$0xf]
        %v1336 = vld [vmem:[#allocation11 + $0x34] sm:$0xf]
        %v1337 = vld [vmem:[#allocation11 + $0x38] sm:$0xf]
        %v1338 = vld [vmem:[#allocation11 + $0x3c] sm:$0xf]
        %v1339 = vld [vmem:[#allocation16] sm:$0x1]
        %v1340 = vld [vmem:[#allocation16 + $0x1] sm:$0x1]
        %v1341 = vld [vmem:[#allocation16 + $0x2] sm:$0x1]
        %v1342 = vld [vmem:[#allocation16 + $0x3] sm:$0x1]
        %v1347 = vlaneseq
        %v1348 = vshrl.u32 %v1347, 7
        %v1349 = vsub.s32 0, %v1348
        %v1350 = vrot.slane %v1339, %v1349
        %v1351 = vlaneseq
        %v1352 = vshrl.u32 %v1351, 7
        %v1353 = vsub.s32 0, %v1352
        %v1354 = vrot.slane %v1340, %v1353
        %v1355 = vlaneseq
        %v1356 = vshrl.u32 %v1355, 7
        %v1357 = vsub.s32 0, %v1356
        %v1358 = vrot.slane %v1341, %v1357
        %v1359 = vlaneseq
        %v1360 = vshrl.u32 %v1359, 7
        %v1361 = vsub.s32 0, %v1360
        %v1362 = vrot.slane %v1342, %v1361
        %v1371 = vunpack.c.l.b16 %v1323
        %v1372 = vunpack.c.l.b16 %v1324
        %v1373 = vunpack.c.l.b16 %v1325
        %v1374 = vunpack.c.l.b16 %v1326
        %v1375 = vpack.c.b16 %v1372, %v1371
        %v1376 = vpack.c.b16 %v1374, %v1373
        %1379 = vmatprep.subr.bf16.mxu0 0
        %1380 = vmatpush1.bf16.msra.mxu0 %v1375
        %1381 = vmatprep.subr.bf16.mxu0 0
        %1382 = vmatpush1.bf16.msra.mxu0 %v1376
        %1383 = vmatprep.subr.bf16.mxu0 0
        %1384 = vmatpush1.bf16.msra.mxu0 0
        %1385 = vmatprep.subr.bf16.mxu0 0
        %1386 = vmatpush1.bf16.msra.mxu0 0
        %1387 = vmatprep.subr.bf16.mxu0 0
        %1388 = vmatpush1.bf16.msra.mxu0 0
        %1389 = vmatprep.subr.bf16.mxu0 0
        %1390 = vmatpush1.bf16.msra.mxu0 0
        %1391 = vmatprep.subr.bf16.mxu0 0
        %1392 = vmatpush1.bf16.msra.mxu0 0
        %1393 = vmatprep.subr.bf16.mxu0 0
        %1394 = vmatpush1.bf16.msra.mxu0 0
        %1395 = vmatprep.subr.bf16.mxu0 0
        %1396 = vmatpush1.bf16.msra.mxu0 0
        %1397 = vmatprep.subr.bf16.mxu0 0
        %1398 = vmatpush1.bf16.msra.mxu0 0
        %1399 = vmatprep.subr.bf16.mxu0 0
        %1400 = vmatpush1.bf16.msra.mxu0 0
        %1401 = vmatprep.subr.bf16.mxu0 0
        %1402 = vmatpush1.bf16.msra.mxu0 0
        %1403 = vmatprep.subr.bf16.mxu0 0
        %1404 = vmatpush1.bf16.msra.mxu0 0
        %1405 = vmatprep.subr.bf16.mxu0 0
        %1406 = vmatpush1.bf16.msra.mxu0 0
        %1407 = vmatprep.subr.bf16.mxu0 0
        %1408 = vmatpush1.bf16.msra.mxu0 0
        %1409 = vmatprep.subr.bf16.mxu0 0
        %1410 = vmatpush1.bf16.msra.mxu0 0
        %1411 = vmatprep.mubr.bf16.mxu0 0
        %1412 = vmatmul.mubr.bf16.gmra.mrb[0].mxu0 %v873
        %v1413 = vpop.f32.mrb[0].mxu0
        %v1414 = vadd.f32 %v1350, %v1413
        %v1415 = vpop.f32.mrb[0].mxu0
        %v1416 = vpop.f32.mrb[0].mxu0
        %v1417 = vpop.f32.mrb[0].mxu0
        %1418 = vdwg.mxu0
        %v1423 = vunpack.c.l.b16 %v1327
        %v1424 = vunpack.c.l.b16 %v1328
        %v1425 = vunpack.c.l.b16 %v1329
        %v1426 = vunpack.c.l.b16 %v1330
        %v1427 = vpack.c.b16 %v1424, %v1423
        %v1428 = vpack.c.b16 %v1426, %v1425
        %1431 = vmatprep.subr.bf16.mxu0 0
        %1432 = vmatpush1.bf16.msra.mxu0 %v1427
        %1433 = vmatprep.subr.bf16.mxu0 0
        %1434 = vmatpush1.bf16.msra.mxu0 %v1428
        %1435 = vmatprep.subr.bf16.mxu0 0
        %1436 = vmatpush1.bf16.msra.mxu0 0
        %1437 = vmatprep.subr.bf16.mxu0 0
        %1438 = vmatpush1.bf16.msra.mxu0 0
        %1439 = vmatprep.subr.bf16.mxu0 0
        %1440 = vmatpush1.bf16.msra.mxu0 0
        %1441 = vmatprep.subr.bf16.mxu0 0
        %1442 = vmatpush1.bf16.msra.mxu0 0
        %1443 = vmatprep.subr.bf16.mxu0 0
        %1444 = vmatpush1.bf16.msra.mxu0 0
        %1445 = vmatprep.subr.bf16.mxu0 0
        %1446 = vmatpush1.bf16.msra.mxu0 0
        %1447 = vmatprep.subr.bf16.mxu0 0
        %1448 = vmatpush1.bf16.msra.mxu0 0
        %1449 = vmatprep.subr.bf16.mxu0 0
        %1450 = vmatpush1.bf16.msra.mxu0 0
        %1451 = vmatprep.subr.bf16.mxu0 0
        %1452 = vmatpush1.bf16.msra.mxu0 0
        %1453 = vmatprep.subr.bf16.mxu0 0
        %1454 = vmatpush1.bf16.msra.mxu0 0
        %1455 = vmatprep.subr.bf16.mxu0 0
        %1456 = vmatpush1.bf16.msra.mxu0 0
        %1457 = vmatprep.subr.bf16.mxu0 0
        %1458 = vmatpush1.bf16.msra.mxu0 0
        %1459 = vmatprep.subr.bf16.mxu0 0
        %1460 = vmatpush1.bf16.msra.mxu0 0
        %1461 = vmatprep.subr.bf16.mxu0 0
        %1462 = vmatpush1.bf16.msra.mxu0 0
        %1463 = vmatprep.mubr.bf16.mxu0 0
        %1464 = vmatmul.mubr.bf16.gmra.mrb[0].mxu0 %v873
        %v1465 = vpop.f32.mrb[0].mxu0
        %v1466 = vadd.f32 %v1354, %v1465
        %v1467 = vpop.f32.mrb[0].mxu0
        %v1468 = vpop.f32.mrb[0].mxu0
        %v1469 = vpop.f32.mrb[0].mxu0
        %1470 = vdwg.mxu0
        %v1475 = vunpack.c.l.b16 %v1331
        %v1476 = vunpack.c.l.b16 %v1332
        %v1477 = vunpack.c.l.b16 %v1333
        %v1478 = vunpack.c.l.b16 %v1334
        %v1479 = vpack.c.b16 %v1476, %v1475
        %v1480 = vpack.c.b16 %v1478, %v1477
        %1483 = vmatprep.subr.bf16.mxu0 0
        %1484 = vmatpush1.bf16.msra.mxu0 %v1479
        %1485 = vmatprep.subr.bf16.mxu0 0
        %1486 = vmatpush1.bf16.msra.mxu0 %v1480
        %1487 = vmatprep.subr.bf16.mxu0 0
        %1488 = vmatpush1.bf16.msra.mxu0 0
        %1489 = vmatprep.subr.bf16.mxu0 0
        %1490 = vmatpush1.bf16.msra.mxu0 0
        %1491 = vmatprep.subr.bf16.mxu0 0
        %1492 = vmatpush1.bf16.msra.mxu0 0
        %1493 = vmatprep.subr.bf16.mxu0 0
        %1494 = vmatpush1.bf16.msra.mxu0 0
        %1495 = vmatprep.subr.bf16.mxu0 0
        %1496 = vmatpush1.bf16.msra.mxu0 0
        %1497 = vmatprep.subr.bf16.mxu0 0
        %1498 = vmatpush1.bf16.msra.mxu0 0
        %1499 = vmatprep.subr.bf16.mxu0 0
        %1500 = vmatpush1.bf16.msra.mxu0 0
        %1501 = vmatprep.subr.bf16.mxu0 0
        %1502 = vmatpush1.bf16.msra.mxu0 0
        %1503 = vmatprep.subr.bf16.mxu0 0
        %1504 = vmatpush1.bf16.msra.mxu0 0
        %1505 = vmatprep.subr.bf16.mxu0 0
        %1506 = vmatpush1.bf16.msra.mxu0 0
        %1507 = vmatprep.subr.bf16.mxu0 0
        %1508 = vmatpush1.bf16.msra.mxu0 0
        %1509 = vmatprep.subr.bf16.mxu0 0
        %1510 = vmatpush1.bf16.msra.mxu0 0
        %1511 = vmatprep.subr.bf16.mxu0 0
        %1512 = vmatpush1.bf16.msra.mxu0 0
        %1513 = vmatprep.subr.bf16.mxu0 0
        %1514 = vmatpush1.bf16.msra.mxu0 0
        %1515 = vmatprep.mubr.bf16.mxu0 0
        %1516 = vmatmul.mubr.bf16.gmra.mrb[0].mxu0 %v873
        %v1517 = vpop.f32.mrb[0].mxu0
        %v1518 = vadd.f32 %v1358, %v1517
        %v1519 = vpop.f32.mrb[0].mxu0
        %v1520 = vpop.f32.mrb[0].mxu0
        %v1521 = vpop.f32.mrb[0].mxu0
        %1522 = vdwg.mxu0
        %v1527 = vunpack.c.l.b16 %v1335
        %v1528 = vunpack.c.l.b16 %v1336
        %v1529 = vunpack.c.l.b16 %v1337
        %v1530 = vunpack.c.l.b16 %v1338
        %v1531 = vpack.c.b16 %v1528, %v1527
        %v1532 = vpack.c.b16 %v1530, %v1529
        %1535 = vmatprep.subr.bf16.mxu0 0
        %1536 = vmatpush1.bf16.msra.mxu0 %v1531
        %1537 = vmatprep.subr.bf16.mxu0 0
        %1538 = vmatpush1.bf16.msra.mxu0 %v1532
        %1539 = vmatprep.subr.bf16.mxu0 0
        %1540 = vmatpush1.bf16.msra.mxu0 0
        %1541 = vmatprep.subr.bf16.mxu0 0
        %1542 = vmatpush1.bf16.msra.mxu0 0
        %1543 = vmatprep.subr.bf16.mxu0 0
        %1544 = vmatpush1.bf16.msra.mxu0 0
        %1545 = vmatprep.subr.bf16.mxu0 0
        %1546 = vmatpush1.bf16.msra.mxu0 0
        %1547 = vmatprep.subr.bf16.mxu0 0
        %1548 = vmatpush1.bf16.msra.mxu0 0
        %1549 = vmatprep.subr.bf16.mxu0 0
        %1550 = vmatpush1.bf16.msra.mxu0 0
        %1551 = vmatprep.subr.bf16.mxu0 0
        %1552 = vmatpush1.bf16.msra.mxu0 0
        %1553 = vmatprep.subr.bf16.mxu0 0
        %1554 = vmatpush1.bf16.msra.mxu0 0
        %1555 = vmatprep.subr.bf16.mxu0 0
        %1556 = vmatpush1.bf16.msra.mxu0 0
        %1557 = vmatprep.subr.bf16.mxu0 0
        %1558 = vmatpush1.bf16.msra.mxu0 0
        %1559 = vmatprep.subr.bf16.mxu0 0
        %1560 = vmatpush1.bf16.msra.mxu0 0
        %1561 = vmatprep.subr.bf16.mxu0 0
        %1562 = vmatpush1.bf16.msra.mxu0 0
        %1563 = vmatprep.subr.bf16.mxu0 0
        %1564 = vmatpush1.bf16.msra.mxu0 0
        %1565 = vmatprep.subr.bf16.mxu0 0
        %1566 = vmatpush1.bf16.msra.mxu0 0
        %1567 = vmatprep.mubr.bf16.mxu0 0
        %1568 = vmatmul.mubr.bf16.gmra.mrb[0].mxu0 %v873
        %v1569 = vpop.f32.mrb[0].mxu0
        %v1570 = vadd.f32 %v1362, %v1569
        %v1571 = vpop.f32.mrb[0].mxu0
        %v1572 = vpop.f32.mrb[0].mxu0
        %v1573 = vpop.f32.mrb[0].mxu0
        %1574 = vdwg.mxu0
        %v1575 = vpack.c.bf16 %v910, %v910
        %v1576 = vpack.c.bf16 %v962, %v962
        %v1577 = vpack.c.bf16 %v1014, %v1014
        %v1578 = vpack.c.bf16 %v1066, %v1066
        %v1579 = vpack.c.bf16 %v1162, %v1162
        %v1580 = vpack.c.bf16 %v1214, %v1214
        %v1581 = vpack.c.bf16 %v1266, %v1266
        %v1582 = vpack.c.bf16 %v1318, %v1318
        %v1583 = vpack.c.bf16 %v1414, %v1414
        %v1584 = vpack.c.bf16 %v1466, %v1466
        %v1585 = vpack.c.bf16 %v1518, %v1518
        %v1586 = vpack.c.bf16 %v1570, %v1570
        %v1587 = vlaneseq
        %v1588 = vshrl.u32 %v1587, 7
        %v1589 = vlaneseq
        %v1590 = vand.u32 %v1589, 127
        %vm1591 = vcmp.le.s32.totalorder %v1590, %v1588
        %vm1592 = vcmask 64512
        %v1594 = vsel %vm1592, %v1575, 0
        %v1597 = vsel %vm1592, %v1579, 0
        %1599 = vmatprep.subr.bf16.mxu0 0
        %1600 = vmatpush1.bf16.xpose.msra.mxu0 %v1597
        %1601 = vmatprep.subr.bf16.mxu0 0
        %1602 = vmatpush1.bf16.xpose.msra.mxu0 0
        %1603 = vmatprep.subr.bf16.mxu0 0
        %1604 = vmatpush1.bf16.xpose.msra.mxu0 0
        %1605 = vmatprep.subr.bf16.mxu0 0
        %1606 = vmatpush1.bf16.xpose.msra.mxu0 0
        %1607 = vmatprep.subr.bf16.mxu0 0
        %1608 = vmatpush1.bf16.xpose.msra.mxu0 0
        %1609 = vmatprep.subr.bf16.mxu0 0
        %1610 = vmatpush1.bf16.xpose.msra.mxu0 0
        %1611 = vmatprep.subr.bf16.mxu0 0
        %1612 = vmatpush1.bf16.xpose.msra.mxu0 0
        %1613 = vmatprep.subr.bf16.mxu0 0
        %1614 = vmatpush1.bf16.xpose.msra.mxu0 0
        %1615 = vmatprep.subr.bf16.mxu0 0
        %1616 = vmatpush1.bf16.xpose.msra.mxu0 0
        %1617 = vmatprep.subr.bf16.mxu0 0
        %1618 = vmatpush1.bf16.xpose.msra.mxu0 0
        %1619 = vmatprep.subr.bf16.mxu0 0
        %1620 = vmatpush1.bf16.xpose.msra.mxu0 0
        %1621 = vmatprep.subr.bf16.mxu0 0
        %1622 = vmatpush1.bf16.xpose.msra.mxu0 0
        %1623 = vmatprep.subr.bf16.mxu0 0
        %1624 = vmatpush1.bf16.xpose.msra.mxu0 0
        %1625 = vmatprep.subr.bf16.mxu0 0
        %1626 = vmatpush1.bf16.xpose.msra.mxu0 0
        %1627 = vmatprep.subr.bf16.mxu0 0
        %1628 = vmatpush1.bf16.xpose.msra.mxu0 0
        %1629 = vmatprep.subr.bf16.mxu0 0
        %1630 = vmatpush1.bf16.xpose.msra.mxu0 0
        %1631 = vmatprep.mubr.bf16.mxu0 0
        %1632 = vmatmul.mubr.bf16.gmra.mrb[0].mxu0 %v1594
        %v1633 = vpop.f32.mrb[0].mxu0
        %v1634 = vadd.f32 0.0, %v1633
        %v1635 = vpop.f32.mrb[0].mxu0
        %v1636 = vpop.f32.mrb[0].mxu0
        %v1637 = vpop.f32.mrb[0].mxu0
        %1638 = vdwg.mxu0
        %v1640 = vsel %vm1592, %v1576, 0
        %v1643 = vsel %vm1592, %v1580, 0
        %1645 = vmatprep.subr.bf16.mxu0 0
        %1646 = vmatpush1.bf16.xpose.msra.mxu0 %v1643
        %1647 = vmatprep.subr.bf16.mxu0 0
        %1648 = vmatpush1.bf16.xpose.msra.mxu0 0
        %1649 = vmatprep.subr.bf16.mxu0 0
        %1650 = vmatpush1.bf16.xpose.msra.mxu0 0
        %1651 = vmatprep.subr.bf16.mxu0 0
        %1652 = vmatpush1.bf16.xpose.msra.mxu0 0
        %1653 = vmatprep.subr.bf16.mxu0 0
        %1654 = vmatpush1.bf16.xpose.msra.mxu0 0
        %1655 = vmatprep.subr.bf16.mxu0 0
        %1656 = vmatpush1.bf16.xpose.msra.mxu0 0
        %1657 = vmatprep.subr.bf16.mxu0 0
        %1658 = vmatpush1.bf16.xpose.msra.mxu0 0
        %1659 = vmatprep.subr.bf16.mxu0 0
        %1660 = vmatpush1.bf16.xpose.msra.mxu0 0
        %1661 = vmatprep.subr.bf16.mxu0 0
        %1662 = vmatpush1.bf16.xpose.msra.mxu0 0
        %1663 = vmatprep.subr.bf16.mxu0 0
        %1664 = vmatpush1.bf16.xpose.msra.mxu0 0
        %1665 = vmatprep.subr.bf16.mxu0 0
        %1666 = vmatpush1.bf16.xpose.msra.mxu0 0
        %1667 = vmatprep.subr.bf16.mxu0 0
        %1668 = vmatpush1.bf16.xpose.msra.mxu0 0
        %1669 = vmatprep.subr.bf16.mxu0 0
        %1670 = vmatpush1.bf16.xpose.msra.mxu0 0
        %1671 = vmatprep.subr.bf16.mxu0 0
        %1672 = vmatpush1.bf16.xpose.msra.mxu0 0
        %1673 = vmatprep.subr.bf16.mxu0 0
        %1674 = vmatpush1.bf16.xpose.msra.mxu0 0
        %1675 = vmatprep.subr.bf16.mxu0 0
        %1676 = vmatpush1.bf16.xpose.msra.mxu0 0
        %1677 = vmatprep.mubr.bf16.mxu0 0
        %1678 = vmatmul.mubr.bf16.gmra.mrb[0].mxu0 %v1640
        %v1679 = vpop.f32.mrb[0].mxu0
        %v1680 = vadd.f32 0.0, %v1679
        %v1681 = vpop.f32.mrb[0].mxu0
        %v1682 = vpop.f32.mrb[0].mxu0
        %v1683 = vpop.f32.mrb[0].mxu0
        %1684 = vdwg.mxu0
        %v1686 = vsel %vm1592, %v1577, 0
        %v1689 = vsel %vm1592, %v1581, 0
        %1691 = vmatprep.subr.bf16.mxu0 0
        %1692 = vmatpush1.bf16.xpose.msra.mxu0 %v1689
        %1693 = vmatprep.subr.bf16.mxu0 0
        %1694 = vmatpush1.bf16.xpose.msra.mxu0 0
        %1695 = vmatprep.subr.bf16.mxu0 0
        %1696 = vmatpush1.bf16.xpose.msra.mxu0 0
        %1697 = vmatprep.subr.bf16.mxu0 0
        %1698 = vmatpush1.bf16.xpose.msra.mxu0 0
        %1699 = vmatprep.subr.bf16.mxu0 0
        %1700 = vmatpush1.bf16.xpose.msra.mxu0 0
        %1701 = vmatprep.subr.bf16.mxu0 0
        %1702 = vmatpush1.bf16.xpose.msra.mxu0 0
        %1703 = vmatprep.subr.bf16.mxu0 0
        %1704 = vmatpush1.bf16.xpose.msra.mxu0 0
        %1705 = vmatprep.subr.bf16.mxu0 0
        %1706 = vmatpush1.bf16.xpose.msra.mxu0 0
        %1707 = vmatprep.subr.bf16.mxu0 0
        %1708 = vmatpush1.bf16.xpose.msra.mxu0 0
        %1709 = vmatprep.subr.bf16.mxu0 0
        %1710 = vmatpush1.bf16.xpose.msra.mxu0 0
        %1711 = vmatprep.subr.bf16.mxu0 0
        %1712 = vmatpush1.bf16.xpose.msra.mxu0 0
        %1713 = vmatprep.subr.bf16.mxu0 0
        %1714 = vmatpush1.bf16.xpose.msra.mxu0 0
        %1715 = vmatprep.subr.bf16.mxu0 0
        %1716 = vmatpush1.bf16.xpose.msra.mxu0 0
        %1717 = vmatprep.subr.bf16.mxu0 0
        %1718 = vmatpush1.bf16.xpose.msra.mxu0 0
        %1719 = vmatprep.subr.bf16.mxu0 0
        %1720 = vmatpush1.bf16.xpose.msra.mxu0 0
        %1721 = vmatprep.subr.bf16.mxu0 0
        %1722 = vmatpush1.bf16.xpose.msra.mxu0 0
        %1723 = vmatprep.mubr.bf16.mxu0 0
        %1724 = vmatmul.mubr.bf16.gmra.mrb[0].mxu0 %v1686
        %v1725 = vpop.f32.mrb[0].mxu0
        %v1726 = vadd.f32 0.0, %v1725
        %v1727 = vpop.f32.mrb[0].mxu0
        %v1728 = vpop.f32.mrb[0].mxu0
        %v1729 = vpop.f32.mrb[0].mxu0
        %1730 = vdwg.mxu0
        %v1732 = vsel %vm1592, %v1578, 0
        %v1735 = vsel %vm1592, %v1582, 0
        %1737 = vmatprep.subr.bf16.mxu0 0
        %1738 = vmatpush1.bf16.xpose.msra.mxu0 %v1735
        %1739 = vmatprep.subr.bf16.mxu0 0
        %1740 = vmatpush1.bf16.xpose.msra.mxu0 0
        %1741 = vmatprep.subr.bf16.mxu0 0
        %1742 = vmatpush1.bf16.xpose.msra.mxu0 0
        %1743 = vmatprep.subr.bf16.mxu0 0
        %1744 = vmatpush1.bf16.xpose.msra.mxu0 0
        %1745 = vmatprep.subr.bf16.mxu0 0
        %1746 = vmatpush1.bf16.xpose.msra.mxu0 0
        %1747 = vmatprep.subr.bf16.mxu0 0
        %1748 = vmatpush1.bf16.xpose.msra.mxu0 0
        %1749 = vmatprep.subr.bf16.mxu0 0
        %1750 = vmatpush1.bf16.xpose.msra.mxu0 0
        %1751 = vmatprep.subr.bf16.mxu0 0
        %1752 = vmatpush1.bf16.xpose.msra.mxu0 0
        %1753 = vmatprep.subr.bf16.mxu0 0
        %1754 = vmatpush1.bf16.xpose.msra.mxu0 0
        %1755 = vmatprep.subr.bf16.mxu0 0
        %1756 = vmatpush1.bf16.xpose.msra.mxu0 0
        %1757 = vmatprep.subr.bf16.mxu0 0
        %1758 = vmatpush1.bf16.xpose.msra.mxu0 0
        %1759 = vmatprep.subr.bf16.mxu0 0
        %1760 = vmatpush1.bf16.xpose.msra.mxu0 0
        %1761 = vmatprep.subr.bf16.mxu0 0
        %1762 = vmatpush1.bf16.xpose.msra.mxu0 0
        %1763 = vmatprep.subr.bf16.mxu0 0
        %1764 = vmatpush1.bf16.xpose.msra.mxu0 0
        %1765 = vmatprep.subr.bf16.mxu0 0
        %1766 = vmatpush1.bf16.xpose.msra.mxu0 0
        %1767 = vmatprep.subr.bf16.mxu0 0
        %1768 = vmatpush1.bf16.xpose.msra.mxu0 0
        %1769 = vmatprep.mubr.bf16.mxu0 0
        %1770 = vmatmul.mubr.bf16.gmra.mrb[0].mxu0 %v1732
        %v1771 = vpop.f32.mrb[0].mxu0
        %v1772 = vadd.f32 0.0, %v1771
        %v1773 = vpop.f32.mrb[0].mxu0
        %v1774 = vpop.f32.mrb[0].mxu0
        %v1775 = vpop.f32.mrb[0].mxu0
        %1776 = vdwg.mxu0
        %v1777 = vsel %vm1591, 1, 0
        %vm1778 = vcmp.eq.s32.totalorder %v1777, 1
        %v1779 = vsel %vm1778, %v1634, -inf
        %v1780 = vsel %vm1778, %v1680, -inf
        %v1781 = vsel %vm1778, %v1726, -inf
        %v1782 = vsel %vm1778, %v1772, -inf
        %v1783 = vsel %vm1592, %v1779, -inf
        %1784 = vmax.xlane.f32.xlu0 %v1783
        %v1785 = vpop.xlane.xlu0 %1784
        %v1786 = vsel %vm1592, %v1780, -inf
        %1787 = vmax.xlane.f32.xlu0 %v1786
        %v1788 = vpop.xlane.xlu0 %1787
        %v1789 = vsel %vm1592, %v1781, -inf
        %1790 = vmax.xlane.f32.xlu0 %v1789
        %v1791 = vpop.xlane.xlu0 %1790
        %v1792 = vsel %vm1592, %v1782, -inf
        %1793 = vmax.xlane.f32.xlu0 %v1792
        %v1794 = vpop.xlane.xlu0 %1793
        %v1795 = vsub.f32 %v1779, %v1785
        %v1796 = vsub.f32 %v1780, %v1788
        %v1797 = vsub.f32 %v1781, %v1791
        %v1798 = vsub.f32 %v1782, %v1794
        %v1799 = vmul.f32 %v1795, 1.442695
        %v1800 = vpow.pop %v1799
        %v1801 = vmul.f32 %v1796, 1.442695
        %v1802 = vpow.pop %v1801
        %v1803 = vmul.f32 %v1797, 1.442695
        %v1804 = vpow.pop %v1803
        %v1805 = vmul.f32 %v1798, 1.442695
        %v1806 = vpow.pop %v1805
        %v1807 = vsel %vm1592, %v1800, 0.0
        %1808 = vadd.xlane.f32.xlu0 %v1807
        %v1809 = vpop.xlane.xlu0 %1808
        %v1810 = vsel %vm1592, %v1802, 0.0
        %1811 = vadd.xlane.f32.xlu0 %v1810
        %v1812 = vpop.xlane.xlu0 %1811
        %v1813 = vsel %vm1592, %v1804, 0.0
        %1814 = vadd.xlane.f32.xlu0 %v1813
        %v1815 = vpop.xlane.xlu0 %1814
        %v1816 = vsel %vm1592, %v1806, 0.0
        %1817 = vadd.xlane.f32.xlu0 %v1816
        %v1818 = vpop.xlane.xlu0 %1817
        %v1819 = vrcp.pop %v1809
        %v1820 = vrcp.pop %v1812
        %v1821 = vrcp.pop %v1815
        %v1822 = vrcp.pop %v1818
        %v1823 = vmul.f32 %v1800, %v1819
        %v1824 = vmul.f32 %v1802, %v1820
        %v1825 = vmul.f32 %v1804, %v1821
        %v1826 = vmul.f32 %v1806, %v1822
        %v1827 = vpack.c.bf16 %v1823, %v1823
        %v1828 = vpack.c.bf16 %v1824, %v1824
        %v1829 = vpack.c.bf16 %v1825, %v1825
        %v1830 = vpack.c.bf16 %v1826, %v1826
        %v1832 = vsel %vm1592, %v1827, 0
        %vm1834 = vcmask 1043456
        %v1836 = vsel %vm1834, %v1583, 0
        %1838 = vmatprep.subr.bf16.mxu0 0
        %1839 = vmatpush1.bf16.msra.mxu0 %v1836
        %1840 = vmatprep.subr.bf16.mxu0 0
        %1841 = vmatpush1.bf16.msra.mxu0 0
        %1842 = vmatprep.subr.bf16.mxu0 0
        %1843 = vmatpush1.bf16.msra.mxu0 0
        %1844 = vmatprep.subr.bf16.mxu0 0
        %1845 = vmatpush1.bf16.msra.mxu0 0
        %1846 = vmatprep.subr.bf16.mxu0 0
        %1847 = vmatpush1.bf16.msra.mxu0 0
        %1848 = vmatprep.subr.bf16.mxu0 0
        %1849 = vmatpush1.bf16.msra.mxu0 0
        %1850 = vmatprep.subr.bf16.mxu0 0
        %1851 = vmatpush1.bf16.msra.mxu0 0
        %1852 = vmatprep.subr.bf16.mxu0 0
        %1853 = vmatpush1.bf16.msra.mxu0 0
        %1854 = vmatprep.subr.bf16.mxu0 0
        %1855 = vmatpush1.bf16.msra.mxu0 0
        %1856 = vmatprep.subr.bf16.mxu0 0
        %1857 = vmatpush1.bf16.msra.mxu0 0
        %1858 = vmatprep.subr.bf16.mxu0 0
        %1859 = vmatpush1.bf16.msra.mxu0 0
        %1860 = vmatprep.subr.bf16.mxu0 0
        %1861 = vmatpush1.bf16.msra.mxu0 0
        %1862 = vmatprep.subr.bf16.mxu0 0
        %1863 = vmatpush1.bf16.msra.mxu0 0
        %1864 = vmatprep.subr.bf16.mxu0 0
        %1865 = vmatpush1.bf16.msra.mxu0 0
        %1866 = vmatprep.subr.bf16.mxu0 0
        %1867 = vmatpush1.bf16.msra.mxu0 0
        %1868 = vmatprep.subr.bf16.mxu0 0
        %1869 = vmatpush1.bf16.msra.mxu0 0
        %1870 = vmatprep.mubr.bf16.mxu0 0
        %1871 = vmatmul.mubr.bf16.gmra.mrb[0].mxu0 %v1832
        %v1872 = vpop.f32.mrb[0].mxu0
        %v1873 = vadd.f32 0.0, %v1872
        %v1874 = vpop.f32.mrb[0].mxu0
        %v1875 = vpop.f32.mrb[0].mxu0
        %v1876 = vpop.f32.mrb[0].mxu0
        %1877 = vdwg.mxu0
        %v1879 = vsel %vm1592, %v1828, 0
        %v1882 = vsel %vm1834, %v1584, 0
        %1884 = vmatprep.subr.bf16.mxu0 0
        %1885 = vmatpush1.bf16.msra.mxu0 %v1882
        %1886 = vmatprep.subr.bf16.mxu0 0
        %1887 = vmatpush1.bf16.msra.mxu0 0
        %1888 = vmatprep.subr.bf16.mxu0 0
        %1889 = vmatpush1.bf16.msra.mxu0 0
        %1890 = vmatprep.subr.bf16.mxu0 0
        %1891 = vmatpush1.bf16.msra.mxu0 0
        %1892 = vmatprep.subr.bf16.mxu0 0
        %1893 = vmatpush1.bf16.msra.mxu0 0
        %1894 = vmatprep.subr.bf16.mxu0 0
        %1895 = vmatpush1.bf16.msra.mxu0 0
        %1896 = vmatprep.subr.bf16.mxu0 0
        %1897 = vmatpush1.bf16.msra.mxu0 0
        %1898 = vmatprep.subr.bf16.mxu0 0
        %1899 = vmatpush1.bf16.msra.mxu0 0
        %1900 = vmatprep.subr.bf16.mxu0 0
        %1901 = vmatpush1.bf16.msra.mxu0 0
        %1902 = vmatprep.subr.bf16.mxu0 0
        %1903 = vmatpush1.bf16.msra.mxu0 0
        %1904 = vmatprep.subr.bf16.mxu0 0
        %1905 = vmatpush1.bf16.msra.mxu0 0
        %1906 = vmatprep.subr.bf16.mxu0 0
        %1907 = vmatpush1.bf16.msra.mxu0 0
        %1908 = vmatprep.subr.bf16.mxu0 0
        %1909 = vmatpush1.bf16.msra.mxu0 0
        %1910 = vmatprep.subr.bf16.mxu0 0
        %1911 = vmatpush1.bf16.msra.mxu0 0
        %1912 = vmatprep.subr.bf16.mxu0 0
        %1913 = vmatpush1.bf16.msra.mxu0 0
        %1914 = vmatprep.subr.bf16.mxu0 0
        %1915 = vmatpush1.bf16.msra.mxu0 0
        %1916 = vmatprep.mubr.bf16.mxu0 0
        %1917 = vmatmul.mubr.bf16.gmra.mrb[0].mxu0 %v1879
        %v1918 = vpop.f32.mrb[0].mxu0
        %v1919 = vadd.f32 0.0, %v1918
        %v1920 = vpop.f32.mrb[0].mxu0
        %v1921 = vpop.f32.mrb[0].mxu0
        %v1922 = vpop.f32.mrb[0].mxu0
        %1923 = vdwg.mxu0
        %v1925 = vsel %vm1592, %v1829, 0
        %v1928 = vsel %vm1834, %v1585, 0
        %1930 = vmatprep.subr.bf16.mxu0 0
        %1931 = vmatpush1.bf16.msra.mxu0 %v1928
        %1932 = vmatprep.subr.bf16.mxu0 0
        %1933 = vmatpush1.bf16.msra.mxu0 0
        %1934 = vmatprep.subr.bf16.mxu0 0
        %1935 = vmatpush1.bf16.msra.mxu0 0
        %1936 = vmatprep.subr.bf16.mxu0 0
        %1937 = vmatpush1.bf16.msra.mxu0 0
        %1938 = vmatprep.subr.bf16.mxu0 0
        %1939 = vmatpush1.bf16.msra.mxu0 0
        %1940 = vmatprep.subr.bf16.mxu0 0
        %1941 = vmatpush1.bf16.msra.mxu0 0
        %1942 = vmatprep.subr.bf16.mxu0 0
        %1943 = vmatpush1.bf16.msra.mxu0 0
        %1944 = vmatprep.subr.bf16.mxu0 0
        %1945 = vmatpush1.bf16.msra.mxu0 0
        %1946 = vmatprep.subr.bf16.mxu0 0
        %1947 = vmatpush1.bf16.msra.mxu0 0
        %1948 = vmatprep.subr.bf16.mxu0 0
        %1949 = vmatpush1.bf16.msra.mxu0 0
        %1950 = vmatprep.subr.bf16.mxu0 0
        %1951 = vmatpush1.bf16.msra.mxu0 0
        %1952 = vmatprep.subr.bf16.mxu0 0
        %1953 = vmatpush1.bf16.msra.mxu0 0
        %1954 = vmatprep.subr.bf16.mxu0 0
        %1955 = vmatpush1.bf16.msra.mxu0 0
        %1956 = vmatprep.subr.bf16.mxu0 0
        %1957 = vmatpush1.bf16.msra.mxu0 0
        %1958 = vmatprep.subr.bf16.mxu0 0
        %1959 = vmatpush1.bf16.msra.mxu0 0
        %1960 = vmatprep.subr.bf16.mxu0 0
        %1961 = vmatpush1.bf16.msra.mxu0 0
        %1962 = vmatprep.mubr.bf16.mxu0 0
        %1963 = vmatmul.mubr.bf16.gmra.mrb[0].mxu0 %v1925
        %v1964 = vpop.f32.mrb[0].mxu0
        %v1965 = vadd.f32 0.0, %v1964
        %v1966 = vpop.f32.mrb[0].mxu0
        %v1967 = vpop.f32.mrb[0].mxu0
        %v1968 = vpop.f32.mrb[0].mxu0
        %1969 = vdwg.mxu0
        %v1971 = vsel %vm1592, %v1830, 0
        %v1974 = vsel %vm1834, %v1586, 0
        %1976 = vmatprep.subr.bf16.mxu0 0
        %1977 = vmatpush1.bf16.msra.mxu0 %v1974
        %1978 = vmatprep.subr.bf16.mxu0 0
        %1979 = vmatpush1.bf16.msra.mxu0 0
        %1980 = vmatprep.subr.bf16.mxu0 0
        %1981 = vmatpush1.bf16.msra.mxu0 0
        %1982 = vmatprep.subr.bf16.mxu0 0
        %1983 = vmatpush1.bf16.msra.mxu0 0
        %1984 = vmatprep.subr.bf16.mxu0 0
        %1985 = vmatpush1.bf16.msra.mxu0 0
        %1986 = vmatprep.subr.bf16.mxu0 0
        %1987 = vmatpush1.bf16.msra.mxu0 0
        %1988 = vmatprep.subr.bf16.mxu0 0
        %1989 = vmatpush1.bf16.msra.mxu0 0
        %1990 = vmatprep.subr.bf16.mxu0 0
        %1991 = vmatpush1.bf16.msra.mxu0 0
        %1992 = vmatprep.subr.bf16.mxu0 0
        %1993 = vmatpush1.bf16.msra.mxu0 0
        %1994 = vmatprep.subr.bf16.mxu0 0
        %1995 = vmatpush1.bf16.msra.mxu0 0
        %1996 = vmatprep.subr.bf16.mxu0 0
        %1997 = vmatpush1.bf16.msra.mxu0 0
        %1998 = vmatprep.subr.bf16.mxu0 0
        %1999 = vmatpush1.bf16.msra.mxu0 0
        %2000 = vmatprep.subr.bf16.mxu0 0
        %2001 = vmatpush1.bf16.msra.mxu0 0
        %2002 = vmatprep.subr.bf16.mxu0 0
        %2003 = vmatpush1.bf16.msra.mxu0 0
        %2004 = vmatprep.subr.bf16.mxu0 0
        %2005 = vmatpush1.bf16.msra.mxu0 0
        %2006 = vmatprep.subr.bf16.mxu0 0
        %2007 = vmatpush1.bf16.msra.mxu0 0
        %2008 = vmatprep.mubr.bf16.mxu0 0
        %2009 = vmatmul.mubr.bf16.gmra.mrb[0].mxu0 %v1971
        %v2010 = vpop.f32.mrb[0].mxu0
        %v2011 = vadd.f32 0.0, %v2010
        %v2012 = vpop.f32.mrb[0].mxu0
        %v2013 = vpop.f32.mrb[0].mxu0
        %v2014 = vpop.f32.mrb[0].mxu0
        %2015 = vdwg.mxu0
        %v2016 = vpack.c.bf16 %v1873, %v1873
        %v2017 = vpack.c.bf16 %v1919, %v1919
        %v2018 = vpack.c.bf16 %v1965, %v1965
        %v2019 = vpack.c.bf16 %v2011, %v2011
        %v2020 = vld [vmem:[#allocation17] sm:$0xf]
        %v2021 = vld [vmem:[#allocation17 + $0x4] sm:$0xf]
        %v2022 = vld [vmem:[#allocation17 + $0x8] sm:$0xf]
        %v2023 = vld [vmem:[#allocation17 + $0xc] sm:$0xf]
        %v2025 = vsel %vm1592, %v2016, 0
        %v2028 = vsel %vm1834, %v2020, 0
        %2030 = vmatprep.subr.bf16.mxu0 0
        %2031 = vmatpush1.bf16.msra.mxu0 %v2028
        %2032 = vmatprep.subr.bf16.mxu0 0
        %2033 = vmatpush1.bf16.msra.mxu0 0
        %2034 = vmatprep.subr.bf16.mxu0 0
        %2035 = vmatpush1.bf16.msra.mxu0 0
        %2036 = vmatprep.subr.bf16.mxu0 0
        %2037 = vmatpush1.bf16.msra.mxu0 0
        %2038 = vmatprep.subr.bf16.mxu0 0
        %2039 = vmatpush1.bf16.msra.mxu0 0
        %2040 = vmatprep.subr.bf16.mxu0 0
        %2041 = vmatpush1.bf16.msra.mxu0 0
        %2042 = vmatprep.subr.bf16.mxu0 0
        %2043 = vmatpush1.bf16.msra.mxu0 0
        %2044 = vmatprep.subr.bf16.mxu0 0
        %2045 = vmatpush1.bf16.msra.mxu0 0
        %2046 = vmatprep.subr.bf16.mxu0 0
        %2047 = vmatpush1.bf16.msra.mxu0 0
        %2048 = vmatprep.subr.bf16.mxu0 0
        %2049 = vmatpush1.bf16.msra.mxu0 0
        %2050 = vmatprep.subr.bf16.mxu0 0
        %2051 = vmatpush1.bf16.msra.mxu0 0
        %2052 = vmatprep.subr.bf16.mxu0 0
        %2053 = vmatpush1.bf16.msra.mxu0 0
        %2054 = vmatprep.subr.bf16.mxu0 0
        %2055 = vmatpush1.bf16.msra.mxu0 0
        %2056 = vmatprep.subr.bf16.mxu0 0
        %2057 = vmatpush1.bf16.msra.mxu0 0
        %2058 = vmatprep.subr.bf16.mxu0 0
        %2059 = vmatpush1.bf16.msra.mxu0 0
        %2060 = vmatprep.subr.bf16.mxu0 0
        %2061 = vmatpush1.bf16.msra.mxu0 0
        %2062 = vmatprep.mubr.bf16.mxu0 0
        %2063 = vmatmul.mubr.bf16.gmra.mrb[0].mxu0 %v2025
        %v2064 = vpop.f32.mrb[0].mxu0
        %v2065 = vadd.f32 0.0, %v2064
        %v2066 = vpop.f32.mrb[0].mxu0
        %v2067 = vpop.f32.mrb[0].mxu0
        %v2068 = vpop.f32.mrb[0].mxu0
        %2069 = vdwg.mxu0
        %v2071 = vsel %vm1592, %v2017, 0
        %v2074 = vsel %vm1834, %v2021, 0
        %2076 = vmatprep.subr.bf16.mxu0 0
        %2077 = vmatpush1.bf16.msra.mxu0 %v2074
        %2078 = vmatprep.subr.bf16.mxu0 0
        %2079 = vmatpush1.bf16.msra.mxu0 0
        %2080 = vmatprep.subr.bf16.mxu0 0
        %2081 = vmatpush1.bf16.msra.mxu0 0
        %2082 = vmatprep.subr.bf16.mxu0 0
        %2083 = vmatpush1.bf16.msra.mxu0 0
        %2084 = vmatprep.subr.bf16.mxu0 0
        %2085 = vmatpush1.bf16.msra.mxu0 0
        %2086 = vmatprep.subr.bf16.mxu0 0
        %2087 = vmatpush1.bf16.msra.mxu0 0
        %2088 = vmatprep.subr.bf16.mxu0 0
        %2089 = vmatpush1.bf16.msra.mxu0 0
        %2090 = vmatprep.subr.bf16.mxu0 0
        %2091 = vmatpush1.bf16.msra.mxu0 0
        %2092 = vmatprep.subr.bf16.mxu0 0
        %2093 = vmatpush1.bf16.msra.mxu0 0
        %2094 = vmatprep.subr.bf16.mxu0 0
        %2095 = vmatpush1.bf16.msra.mxu0 0
        %2096 = vmatprep.subr.bf16.mxu0 0
        %2097 = vmatpush1.bf16.msra.mxu0 0
        %2098 = vmatprep.subr.bf16.mxu0 0
        %2099 = vmatpush1.bf16.msra.mxu0 0
        %2100 = vmatprep.subr.bf16.mxu0 0
        %2101 = vmatpush1.bf16.msra.mxu0 0
        %2102 = vmatprep.subr.bf16.mxu0 0
        %2103 = vmatpush1.bf16.msra.mxu0 0
        %2104 = vmatprep.subr.bf16.mxu0 0
        %2105 = vmatpush1.bf16.msra.mxu0 0
        %2106 = vmatprep.subr.bf16.mxu0 0
        %2107 = vmatpush1.bf16.msra.mxu0 0
        %2108 = vmatprep.mubr.bf16.mxu0 0
        %2109 = vmatmul.mubr.bf16.gmra.mrb[0].mxu0 %v2071
        %v2110 = vpop.f32.mrb[0].mxu0
        %v2111 = vadd.f32 0.0, %v2110
        %v2112 = vpop.f32.mrb[0].mxu0
        %v2113 = vpop.f32.mrb[0].mxu0
        %v2114 = vpop.f32.mrb[0].mxu0
        %2115 = vdwg.mxu0
        %v2117 = vsel %vm1592, %v2018, 0
        %v2120 = vsel %vm1834, %v2022, 0
        %2122 = vmatprep.subr.bf16.mxu0 0
        %2123 = vmatpush1.bf16.msra.mxu0 %v2120
        %2124 = vmatprep.subr.bf16.mxu0 0
        %2125 = vmatpush1.bf16.msra.mxu0 0
        %2126 = vmatprep.subr.bf16.mxu0 0
        %2127 = vmatpush1.bf16.msra.mxu0 0
        %2128 = vmatprep.subr.bf16.mxu0 0
        %2129 = vmatpush1.bf16.msra.mxu0 0
        %2130 = vmatprep.subr.bf16.mxu0 0
        %2131 = vmatpush1.bf16.msra.mxu0 0
        %2132 = vmatprep.subr.bf16.mxu0 0
        %2133 = vmatpush1.bf16.msra.mxu0 0
        %2134 = vmatprep.subr.bf16.mxu0 0
        %2135 = vmatpush1.bf16.msra.mxu0 0
        %2136 = vmatprep.subr.bf16.mxu0 0
        %2137 = vmatpush1.bf16.msra.mxu0 0
        %2138 = vmatprep.subr.bf16.mxu0 0
        %2139 = vmatpush1.bf16.msra.mxu0 0
        %2140 = vmatprep.subr.bf16.mxu0 0
        %2141 = vmatpush1.bf16.msra.mxu0 0
        %2142 = vmatprep.subr.bf16.mxu0 0
        %2143 = vmatpush1.bf16.msra.mxu0 0
        %2144 = vmatprep.subr.bf16.mxu0 0
        %2145 = vmatpush1.bf16.msra.mxu0 0
        %2146 = vmatprep.subr.bf16.mxu0 0
        %2147 = vmatpush1.bf16.msra.mxu0 0
        %2148 = vmatprep.subr.bf16.mxu0 0
        %2149 = vmatpush1.bf16.msra.mxu0 0
        %2150 = vmatprep.subr.bf16.mxu0 0
        %2151 = vmatpush1.bf16.msra.mxu0 0
        %2152 = vmatprep.subr.bf16.mxu0 0
        %2153 = vmatpush1.bf16.msra.mxu0 0
        %2154 = vmatprep.mubr.bf16.mxu0 0
        %2155 = vmatmul.mubr.bf16.gmra.mrb[0].mxu0 %v2117
        %v2156 = vpop.f32.mrb[0].mxu0
        %v2157 = vadd.f32 0.0, %v2156
        %v2158 = vpop.f32.mrb[0].mxu0
        %v2159 = vpop.f32.mrb[0].mxu0
        %v2160 = vpop.f32.mrb[0].mxu0
        %2161 = vdwg.mxu0
        %v2163 = vsel %vm1592, %v2019, 0
        %v2166 = vsel %vm1834, %v2023, 0
        %2168 = vmatprep.subr.bf16.mxu0 0
        %2169 = vmatpush1.bf16.msra.mxu0 %v2166
        %2170 = vmatprep.subr.bf16.mxu0 0
        %2171 = vmatpush1.bf16.msra.mxu0 0
        %2172 = vmatprep.subr.bf16.mxu0 0
        %2173 = vmatpush1.bf16.msra.mxu0 0
        %2174 = vmatprep.subr.bf16.mxu0 0
        %2175 = vmatpush1.bf16.msra.mxu0 0
        %2176 = vmatprep.subr.bf16.mxu0 0
        %2177 = vmatpush1.bf16.msra.mxu0 0
        %2178 = vmatprep.subr.bf16.mxu0 0
        %2179 = vmatpush1.bf16.msra.mxu0 0
        %2180 = vmatprep.subr.bf16.mxu0 0
        %2181 = vmatpush1.bf16.msra.mxu0 0
        %2182 = vmatprep.subr.bf16.mxu0 0
        %2183 = vmatpush1.bf16.msra.mxu0 0
        %2184 = vmatprep.subr.bf16.mxu0 0
        %2185 = vmatpush1.bf16.msra.mxu0 0
        %2186 = vmatprep.subr.bf16.mxu0 0
        %2187 = vmatpush1.bf16.msra.mxu0 0
        %2188 = vmatprep.subr.bf16.mxu0 0
        %2189 = vmatpush1.bf16.msra.mxu0 0
        %2190 = vmatprep.subr.bf16.mxu0 0
        %2191 = vmatpush1.bf16.msra.mxu0 0
        %2192 = vmatprep.subr.bf16.mxu0 0
        %2193 = vmatpush1.bf16.msra.mxu0 0
        %2194 = vmatprep.subr.bf16.mxu0 0
        %2195 = vmatpush1.bf16.msra.mxu0 0
        %2196 = vmatprep.subr.bf16.mxu0 0
        %2197 = vmatpush1.bf16.msra.mxu0 0
        %2198 = vmatprep.subr.bf16.mxu0 0
        %2199 = vmatpush1.bf16.msra.mxu0 0
        %2200 = vmatprep.mubr.bf16.mxu0 0
        %2201 = vmatmul.mubr.bf16.gmra.mrb[0].mxu0 %v2163
        %v2202 = vpop.f32.mrb[0].mxu0
        %v2203 = vadd.f32 0.0, %v2202
        %v2204 = vpop.f32.mrb[0].mxu0
        %v2205 = vpop.f32.mrb[0].mxu0
        %v2206 = vpop.f32.mrb[0].mxu0
        %2207 = vdwg.mxu0
        %v2208 = vsel %vm786, %v2065, 0.0
        %v2209 = vsel %vm786, %v2111, 0.0
        %v2210 = vadd.f32 %v2208, %v2209
        %v2211 = vsel %vm786, %v2157, 0.0
        %v2212 = vadd.f32 %v2210, %v2211
        %v2213 = vsel %vm786, %v2203, 0.0
        %v2214 = vadd.f32 %v2212, %v2213
        %v2215 = vld [vmem:[#allocation19] sm:$0x1]
        %v2217 = vlaneseq
        %v2218 = vshrl.u32 %v2217, 7
        %v2219 = vsub.s32 0, %v2218
        %v2220 = vrot.slane %v2215, %v2219
        %v2222 = vadd.f32 %v2214, %v2220
        %v2223 = vadd.f32 %v783, %v2222
        %v2224 = vld [vmem:[#allocation20] sm:$0x1]
        %v2225 = vld [vmem:[#allocation22] sm:$0x1]
        %v2226 = vsel %vm786, %v2223, 0.0
        %2227 = vadd.xlane.f32.xlu0 %v2226
        %v2228 = vpop.xlane.xlu0 %2227
        %v2229 = vmul.f32 %v2228, %v790
        %v2230 = vsub.f32 %v2223, %v2229
        %v2231 = vmul.f32 %v2230, %v2230
        %v2232 = vsel %vm786, %v2231, 0.0
        %2233 = vadd.xlane.f32.xlu0 %v2232
        %v2234 = vpop.xlane.xlu0 %2233
        %v2235 = vmul.f32 %v2234, %v790
        %v2236 = vadd.f32 %v2235, 1e-05
        %v2237 = vrsqrt.pop %v2236
        %v2238 = vmul.f32 %v2230, %v2237
        %v2240 = vlaneseq
        %v2241 = vshrl.u32 %v2240, 7
        %v2242 = vsub.s32 0, %v2241
        %v2243 = vrot.slane %v2224, %v2242
        %v2245 = vmul.f32 %v2238, %v2243
        %v2247 = vlaneseq
        %v2248 = vshrl.u32 %v2247, 7
        %v2249 = vsub.s32 0, %v2248
        %v2250 = vrot.slane %v2225, %v2249
        %v2252 = vadd.f32 %v2245, %v2250
        %v2253 = vpack.c.bf16 %v2252, %v2252
        %v2254 = vld [vmem:[#allocation23] sm:$0xf]
        %v2255 = vld [vmem:[#allocation23 + $0x4] sm:$0xf]
        %v2256 = vld [vmem:[#allocation23 + $0x8] sm:$0xf]
        %v2257 = vld [vmem:[#allocation23 + $0xc] sm:$0xf]
        %v2258 = vld [vmem:[#allocation25] sm:$0x1]
        %v2260 = vlaneseq
        %v2261 = vshrl.u32 %v2260, 7
        %v2262 = vsub.s32 0, %v2261
        %v2263 = vrot.slane %v2258, %v2262
        %v2269 = vunpack.c.l.b16 %v2254
        %v2270 = vunpack.c.l.b16 %v2255
        %v2271 = vunpack.c.l.b16 %v2256
        %v2272 = vunpack.c.l.b16 %v2257
        %v2273 = vpack.c.b16 %v2270, %v2269
        %v2274 = vpack.c.b16 %v2272, %v2271
        %v2278 = vsel %vm786, %v2253, 0
        %2280 = vmatprep.subr.bf16.mxu0 0
        %2281 = vmatpush1.bf16.msra.mxu0 %v2273
        %2282 = vmatprep.subr.bf16.mxu0 0
        %2283 = vmatpush1.bf16.msra.mxu0 %v2274
        %2284 = vmatprep.subr.bf16.mxu0 0
        %2285 = vmatpush1.bf16.msra.mxu0 0
        %2286 = vmatprep.subr.bf16.mxu0 0
        %2287 = vmatpush1.bf16.msra.mxu0 0
        %2288 = vmatprep.subr.bf16.mxu0 0
        %2289 = vmatpush1.bf16.msra.mxu0 0
        %2290 = vmatprep.subr.bf16.mxu0 0
        %2291 = vmatpush1.bf16.msra.mxu0 0
        %2292 = vmatprep.subr.bf16.mxu0 0
        %2293 = vmatpush1.bf16.msra.mxu0 0
        %2294 = vmatprep.subr.bf16.mxu0 0
        %2295 = vmatpush1.bf16.msra.mxu0 0
        %2296 = vmatprep.subr.bf16.mxu0 0
        %2297 = vmatpush1.bf16.msra.mxu0 0
        %2298 = vmatprep.subr.bf16.mxu0 0
        %2299 = vmatpush1.bf16.msra.mxu0 0
        %2300 = vmatprep.subr.bf16.mxu0 0
        %2301 = vmatpush1.bf16.msra.mxu0 0
        %2302 = vmatprep.subr.bf16.mxu0 0
        %2303 = vmatpush1.bf16.msra.mxu0 0
        %2304 = vmatprep.subr.bf16.mxu0 0
        %2305 = vmatpush1.bf16.msra.mxu0 0
        %2306 = vmatprep.subr.bf16.mxu0 0
        %2307 = vmatpush1.bf16.msra.mxu0 0
        %2308 = vmatprep.subr.bf16.mxu0 0
        %2309 = vmatpush1.bf16.msra.mxu0 0
        %2310 = vmatprep.subr.bf16.mxu0 0
        %2311 = vmatpush1.bf16.msra.mxu0 0
        %2312 = vmatprep.mubr.bf16.mxu0 0
        %2313 = vmatmul.mubr.bf16.gmra.mrb[0].mxu0 %v2278
        %v2314 = vpop.f32.mrb[0].mxu0
        %v2315 = vadd.f32 %v2263, %v2314
        %v2316 = vpop.f32.mrb[0].mxu0
        %v2317 = vpop.f32.mrb[0].mxu0
        %v2318 = vpop.f32.mrb[0].mxu0
        %2319 = vdwg.mxu0
        %v2320 = vmax.f32 %v2315, 0.0
        %v2321 = vpack.c.bf16 %v2320, %v2320
        %v2322 = vld [vmem:[#allocation26] sm:$0xf]
        %v2323 = vld [vmem:[#allocation26 + $0x4] sm:$0xf]
        %v2324 = vld [vmem:[#allocation26 + $0x8] sm:$0xf]
        %v2325 = vld [vmem:[#allocation26 + $0xc] sm:$0xf]
        %v2326 = vld [vmem:[#allocation26 + $0x10] sm:$0xf]
        %v2327 = vld [vmem:[#allocation26 + $0x14] sm:$0xf]
        %v2328 = vld [vmem:[#allocation26 + $0x18] sm:$0xf]
        %v2329 = vld [vmem:[#allocation26 + $0x1c] sm:$0xf]
        %v2330 = vld [vmem:[#allocation26 + $0x20] sm:$0xf]
        %v2331 = vld [vmem:[#allocation26 + $0x24] sm:$0xf]
        %v2332 = vld [vmem:[#allocation26 + $0x28] sm:$0xf]
        %v2333 = vld [vmem:[#allocation26 + $0x2c] sm:$0xf]
        %v2334 = vld [vmem:[#allocation26 + $0x30] sm:$0xf]
        %v2335 = vld [vmem:[#allocation26 + $0x34] sm:$0xf]
        %v2336 = vld [vmem:[#allocation26 + $0x38] sm:$0xf]
        %v2337 = vld [vmem:[#allocation26 + $0x3c] sm:$0xf]
        %v2338 = vld [vmem:[#allocation28] sm:$0x1]
        %v2340 = vlaneseq
        %v2341 = vshrl.u32 %v2340, 7
        %v2342 = vsub.s32 0, %v2341
        %v2343 = vrot.slane %v2338, %v2342
        %v2361 = vunpack.c.l.b16 %v2322
        %v2362 = vunpack.c.l.b16 %v2323
        %v2363 = vunpack.c.l.b16 %v2324
        %v2364 = vunpack.c.l.b16 %v2325
        %v2365 = vunpack.c.l.b16 %v2326
        %v2366 = vunpack.c.l.b16 %v2327
        %v2367 = vunpack.c.l.b16 %v2328
        %v2368 = vunpack.c.l.b16 %v2329
        %v2369 = vunpack.c.l.b16 %v2330
        %v2370 = vunpack.c.l.b16 %v2331
        %v2371 = vunpack.c.l.b16 %v2332
        %v2372 = vunpack.c.l.b16 %v2333
        %v2373 = vunpack.c.l.b16 %v2334
        %v2374 = vunpack.c.l.b16 %v2335
        %v2375 = vunpack.c.l.b16 %v2336
        %v2376 = vunpack.c.l.b16 %v2337
        %v2377 = vpack.c.b16 %v2362, %v2361
        %v2378 = vpack.c.b16 %v2364, %v2363
        %v2379 = vpack.c.b16 %v2366, %v2365
        %v2380 = vpack.c.b16 %v2368, %v2367
        %v2381 = vpack.c.b16 %v2370, %v2369
        %v2382 = vpack.c.b16 %v2372, %v2371
        %v2383 = vpack.c.b16 %v2374, %v2373
        %v2384 = vpack.c.b16 %v2376, %v2375
        %2393 = vmatprep.subr.bf16.mxu0 0
        %2394 = vmatpush1.bf16.msra.mxu0 %v2377
        %2395 = vmatprep.subr.bf16.mxu0 0
        %2396 = vmatpush1.bf16.msra.mxu0 %v2378
        %2397 = vmatprep.subr.bf16.mxu0 0
        %2398 = vmatpush1.bf16.msra.mxu0 %v2379
        %2399 = vmatprep.subr.bf16.mxu0 0
        %2400 = vmatpush1.bf16.msra.mxu0 %v2380
        %2401 = vmatprep.subr.bf16.mxu0 0
        %2402 = vmatpush1.bf16.msra.mxu0 %v2381
        %2403 = vmatprep.subr.bf16.mxu0 0
        %2404 = vmatpush1.bf16.msra.mxu0 %v2382
        %2405 = vmatprep.subr.bf16.mxu0 0
        %2406 = vmatpush1.bf16.msra.mxu0 %v2383
        %2407 = vmatprep.subr.bf16.mxu0 0
        %2408 = vmatpush1.bf16.msra.mxu0 %v2384
        %2409 = vmatprep.subr.bf16.mxu0 0
        %2410 = vmatpush1.bf16.msra.mxu0 0
        %2411 = vmatprep.subr.bf16.mxu0 0
        %2412 = vmatpush1.bf16.msra.mxu0 0
        %2413 = vmatprep.subr.bf16.mxu0 0
        %2414 = vmatpush1.bf16.msra.mxu0 0
        %2415 = vmatprep.subr.bf16.mxu0 0
        %2416 = vmatpush1.bf16.msra.mxu0 0
        %2417 = vmatprep.subr.bf16.mxu0 0
        %2418 = vmatpush1.bf16.msra.mxu0 0
        %2419 = vmatprep.subr.bf16.mxu0 0
        %2420 = vmatpush1.bf16.msra.mxu0 0
        %2421 = vmatprep.subr.bf16.mxu0 0
        %2422 = vmatpush1.bf16.msra.mxu0 0
        %2423 = vmatprep.subr.bf16.mxu0 0
        %2424 = vmatpush1.bf16.msra.mxu0 0
        %2425 = vmatprep.mubr.bf16.mxu0 0
        %2426 = vmatmul.mubr.bf16.gmra.mrb[0].mxu0 %v2321
        %v2427 = vpop.f32.mrb[0].mxu0
        %v2428 = vadd.f32 %v2343, %v2427
        %v2429 = vpop.f32.mrb[0].mxu0
        %v2430 = vpop.f32.mrb[0].mxu0
        %v2431 = vpop.f32.mrb[0].mxu0
        %2432 = vdwg.mxu0
        %v2433 = vadd.f32 %v2223, %v2428
        %2434 = vst.msk [vmem:[%s781] sm:$0xff] %vm786, %v2433
        %s2435 = sand.u32 %s412, 1
        %s2436 = scalar_lea.sflag [#allocation4], %s2435
        %s2437 = sand.u32 %s412, 1
        %s2438 = smul.addr %s2437, 8
        %s2439 = scalar_lea.vmem [#allocation29], %s2438
        // Predicated region
        $region157: #{tpu_custom_call.1} parent=87 // pred_check
          %p2440 = pneg %p422
        $region158: #{tpu_custom_call.1} parent=87 // pred_check_branch
          %2442 = sbr.rel (%p2440) target = $region160
        $region159: #{tpu_custom_call.1} parent=87 // pred_region
          %s2444 = ssub.s32 128, 128
          %2445 = vsyncadd %s2436, %s2444
          %s2446 = smul.addr %s42, 128
          %s2447 = scalar_lea.hbm %s17, %s2446
          %s2449 = sshll.u32 %s2439, 4
          %s2450 = int_to_ptr.vmem [resolvable:$true] %s2449
          %2452 = dma.vmem_to_hbm [thread:$0]  %s2450, 128, %s2447, %s2436
        $region160: #{tpu_custom_call.1} parent=87 // pred_fallthru
          _
      $region88: #{tpu_custom_call.1} parent=5 // pred_fallthru
        _
      %p2453 = scmp.le.s32.totalorder 2, %s37
      // Predicated region
      $region161: #{tpu_custom_call.1} parent=5 // pred_check
        %p2454 = pneg %p2453
      $region162: #{tpu_custom_call.1} parent=5 // pred_check_branch
        %2456 = sbr.rel (%p2454) target = $region164
      $region163: #{tpu_custom_call.1} parent=5 // pred_region
        %s2457 = ssub.s32 %s37, 2
        // Predicated region
        $region165: #{tpu_custom_call.1} parent=163 // pred_check
          %p2458 = pneg %p428
        $region166: #{tpu_custom_call.1} parent=163 // pred_check_branch
          %2460 = sbr.rel (%p2458) target = $region168
        $region167: #{tpu_custom_call.1} parent=163 // pred_region
          %s2461 = sand.u32 %s413, 1
          %s2462 = scalar_lea.sflag [#allocation4], %s2461
          %s2463 = sand.u32 %s413, 1
          %s2464 = smul.addr %s2463, 8
          %s2465 = scalar_lea.vmem [#allocation29], %s2464
          %2466 = dma.done %s2462, 128
        $region168: #{tpu_custom_call.1} parent=163 // pred_fallthru
          _
      $region164: #{tpu_custom_call.1} parent=5 // pred_fallthru
        _
    $region6: #{tpu_custom_call.1} parent=1 // loop_footer
      %s41 = sadd.s32 1, %s37
    $region7: #{tpu_custom_call.1} parent=1 // loop_footer_branch
      %36 = sbr.rel target = $region3
    $region8: #{tpu_custom_call.1} parent=1 // loop_exit
      _
    %2467 = vsyncpa [#allocation3], 1
    %s2468 = scalar_lea.sflag [#allocation3], 1
    %2469 = vsyncpa %s2468, 1
    %2470 = vsyncpa [#allocation6], 1
    %2471 = vsyncpa [#allocation9], 1
    %2472 = vsyncpa [#allocation12], 1
    %2473 = vsyncpa [#allocation15], 1
    %2474 = vsyncpa [#allocation18], 1
    %2475 = vsyncpa [#allocation21], 1
    %2476 = vsyncpa [#allocation24], 1
    %2477 = vsyncpa [#allocation27], 1
    %2478 = vsyncpa [#allocation4], 1
    %s2479 = scalar_lea.sflag [#allocation4], 1
    %2480 = vsyncpa %s2479, 1

</llo_original>
